<compile_context>
chip_gen: v6e
topology: v6e:2x2x1
jax: 0.10.0
libtpu: 0.0.40
codegen_flags: <defaults>
</compile_context>

<pallas_src>
import functools

import jax
import jax.numpy as jnp
from jax.experimental import pallas as pl
from jax.experimental.pallas import tpu as pltpu


# ---------------------------------------------------------------------------
# Fused (bi)directional LSTM recurrence kernel.
# Gate-major, direction-interleaved column layout of width G = 4*H*dirs:
#   [ i_f i_b | f_f f_b | g_f g_b | o_f o_b ]   (dirs = 2)
# State layout (width S = H*dirs):  [ h_f | h_b ].
# ---------------------------------------------------------------------------
def _fused_lstm_kernel(xp_ref, whh_ref, out_ref, hn_ref, cn_ref, *, T, H, dirs):
    """
    xp_ref : (T, Bp, G)   precomputed x @ W_ih + b (time-major)
    whh_ref: (S, G)       block-diagonal stacked recurrent weights
    out_ref: (T, Bp, dirs*H)  per-timestep hidden states (time-major)
    hn_ref : (dirs, Bp, H)    final hidden state per direction
    cn_ref : (dirs, Bp, H)    final cell state per direction
    """
    Bp = out_ref.shape[1]
    S = H * dirs
    G = 4 * S

    whh = whh_ref[...]                                    # loop-invariant, load once

    if dirs == 2:
        # forward direction occupies the first H lanes of every S-wide gate group
        lane = jax.lax.broadcasted_iota(jnp.int32, (Bp, G), 1)
        fwd_mask = (lane % S) < H                         # hoisted out of the loop

    h = jnp.zeros((Bp, S), jnp.float32)
    c = jnp.zeros((Bp, S), jnp.float32)

    # Fully-unrolled static loop (T is small): equivalent to
    # lax.fori_loop(..., unroll=True) and gives the scheduler full visibility.
    for i in range(T):
        if dirs == 2:
            # forward consumes x[i], backward consumes x[T-1-i]
            xp_t = jnp.where(fwd_mask, xp_ref[i], xp_ref[T - 1 - i])
        else:
            xp_t = xp_ref[i]

        gates = xp_t + jnp.dot(h, whh, preferred_element_type=jnp.float32)  # (Bp, G)

        # full-width transcendentals, then contiguous S-wide gate slices
        sg = jax.nn.sigmoid(gates)
        th = jnp.tanh(gates)
        i_g = sg[:, 0 * S:1 * S]
        f_g = sg[:, 1 * S:2 * S]
        g_g = th[:, 2 * S:3 * S]
        o_g = sg[:, 3 * S:4 * S]

        c = f_g * c + i_g * g_g
        h = o_g * jnp.tanh(c)

        out_ref[i, :, 0:H] = h[:, 0:H]                            # forward @ time i
        if dirs == 2:
            out_ref[T - 1 - i, :, H:2 * H] = h[:, H:2 * H]        # backward @ time T-1-i

    # final states written exactly once (not every step)
    for d in range(dirs):
        hn_ref[d] = h[:, d * H:(d + 1) * H]
        cn_ref[d] = c[:, d * H:(d + 1) * H]


# ---------------------------------------------------------------------------
# Weight stacking (host side, weight-sized work only).
# ---------------------------------------------------------------------------
def _stack_weights(params, H, dirs):
    """Gate-major, direction-interleaved stacking of PyTorch LSTM weights.

    Returns:
      w_ih_cat (E, 4*H*dirs), w_hh_cat (H*dirs, 4*H*dirs) block-diagonal over
      directions, bias_cat (1, 4*H*dirs).
    """
    sfx = ["f", "b"][:dirs]
    S = H * dirs
    wih_cols, whh_cols, b_cols = [], [], []
    for k in range(4):                                    # PyTorch gate order i, f, g, o
        for d in range(dirs):
            w_ih = jnp.asarray(params[f"w_ih_{sfx[d]}"], jnp.float32)   # (4H, E)
            w_hh = jnp.asarray(params[f"w_hh_{sfx[d]}"], jnp.float32)   # (4H, H)
            b = (params[f"b_ih_{sfx[d]}"] + params[f"b_hh_{sfx[d]}"]).astype(jnp.float32)
            wih_cols.append(w_ih[k * H:(k + 1) * H, :].T)               # (E, H)
            blk = jnp.zeros((S, H), jnp.float32)
            blk = blk.at[d * H:(d + 1) * H, :].set(w_hh[k * H:(k + 1) * H, :].T)
            whh_cols.append(blk)                                        # (S, H)
            b_cols.append(b[k * H:(k + 1) * H])
    w_ih_cat = jnp.concatenate(wih_cols, axis=1)          # (E, G)
    w_hh_cat = jnp.concatenate(whh_cols, axis=1)          # (S, G)
    bias_cat = jnp.concatenate(b_cols)[None, :]           # (1, G)
    return w_ih_cat, w_hh_cat, bias_cat


# ---------------------------------------------------------------------------
# LeanModel forward: embed(x) -> LSTM.
# ---------------------------------------------------------------------------
def lean_forward(tokens, params, bidirectional):
    # tokens: (B, T) int32
    dirs = 2 if bidirectional else 1
    B, T = tokens.shape
    H = params["w_hh_f"].shape[1]
    Bp = max(8, ((B + 7) // 8) * 8)                       # pad batch to sublane width

    w_ih_cat, w_hh_cat, bias_cat = _stack_weights(params, H, dirs)

    # Pre-multiply the embedding table by the stacked input weights: one small
    # weight-sized matmul replaces T per-step input projections; per-token gate
    # preactivations then come from an exact gather, directly time-major (no
    # activation transpose / reverse ever materialized).
    m = jnp.dot(params["embed"].astype(jnp.float32), w_ih_cat) + bias_cat   # (V, G)

    tok_tb = jnp.transpose(tokens.astype(jnp.int32))      # (T, B) -- tiny index array
    if Bp != B:
        tok_tb = jnp.pad(tok_tb, ((0, 0), (0, Bp - B)))   # pad rows are ignored later
    xp = jnp.take(m, tok_tb, axis=0)                      # (T, Bp, G)

    kernel = functools.partial(_fused_lstm_kernel, T=T, H=H, dirs=dirs)
    out_t, h_n, c_n = pl.pallas_call(
        kernel,
        out_shape=(
            jax.ShapeDtypeStruct((T, Bp, dirs * H), jnp.float32),
            jax.ShapeDtypeStruct((dirs, Bp, H), jnp.float32),
            jax.ShapeDtypeStruct((dirs, Bp, H), jnp.float32),
        ),
        in_specs=[
            pl.BlockSpec(memory_space=pltpu.MemorySpace.VMEM),   # xp, whole array
            pl.BlockSpec(memory_space=pltpu.MemorySpace.VMEM),   # w_hh_cat
        ],
        out_specs=(
            pl.BlockSpec(memory_space=pltpu.MemorySpace.VMEM),
            pl.BlockSpec(memory_space=pltpu.MemorySpace.VMEM),
            pl.BlockSpec(memory_space=pltpu.MemorySpace.VMEM),
        ),
    )(xp, w_hh_cat)

    output = jnp.transpose(out_t[:, :B, :], (1, 0, 2))    # (B, T, dirs*H) batch-first
    return output, (h_n[:, :B, :], c_n[:, :B, :])


# ---------------------------------------------------------------------------
# Pure-JAX reference LSTM for correctness check.
# ---------------------------------------------------------------------------
def _ref_one_direction(x_tbe, w_ih, w_hh, b_ih, b_hh):
    H = w_hh.shape[1]
    b = b_ih + b_hh

    def step(carry, x_t):
        h, c = carry
        gates = x_t @ w_ih.T + h @ w_hh.T + b
        i = jax.nn.sigmoid(gates[:, 0 * H:1 * H])
        f = jax.nn.sigmoid(gates[:, 1 * H:2 * H])
        g = jnp.tanh(gates[:, 2 * H:3 * H])
        o = jax.nn.sigmoid(gates[:, 3 * H:4 * H])
        c = f * c + i * g
        h = o * jnp.tanh(c)
        return (h, c), h

    B = x_tbe.shape[1]
    init = (jnp.zeros((B, H), jnp.float32), jnp.zeros((B, H), jnp.float32))
    (h, c), out = jax.lax.scan(step, init, x_tbe)
    return out, h, c


def _ref_forward(tokens, params, bidirectional):
    emb = jnp.take(params["embed"], tokens, axis=0)
    x_tbe = jnp.transpose(emb, (1, 0, 2)).astype(jnp.float32)
    out_f, h_f, c_f = _ref_one_direction(
        x_tbe, params["w_ih_f"], params["w_hh_f"],
        params["b_ih_f"], params["b_hh_f"])
    if not bidirectional:
        return jnp.transpose(out_f, (1, 0, 2)), (h_f[None], c_f[None])
    out_b, h_b, c_b = _ref_one_direction(
        x_tbe[::-1], params["w_ih_b"], params["w_hh_b"],
        params["b_ih_b"], params["b_hh_b"])
    out_b = out_b[::-1]
    output = jnp.transpose(jnp.concatenate([out_f, out_b], -1), (1, 0, 2))
    return output, (jnp.stack([h_f, h_b]), jnp.stack([c_f, c_b]))


if __name__ == "__main__":
    # net_params analogue: embed_size=32, hidden_size=32, bidirectional=True
    VOCAB = 16   # len(vocab.stoi)
    E = 32
    H = 32
    B = 2
    T = 8
    BIDIRECTIONAL = True

    key = jax.random.PRNGKey(0)
    ks = jax.random.split(key, 12)
    scale = 0.1
    params = {
        "embed":  scale * jax.random.normal(ks[0], (VOCAB, E), jnp.float32),
        "w_ih_f": scale * jax.random.normal(ks[1], (4 * H, E), jnp.float32),
        "w_hh_f": scale * jax.random.normal(ks[2], (4 * H, H), jnp.float32),
        "b_ih_f": scale * jax.random.normal(ks[3], (4 * H,), jnp.float32),
        "b_hh_f": scale * jax.random.normal(ks[4], (4 * H,), jnp.float32),
        "w_ih_b": scale * jax.random.normal(ks[5], (4 * H, E), jnp.float32),
        "w_hh_b": scale * jax.random.normal(ks[6], (4 * H, H), jnp.float32),
        "b_ih_b": scale * jax.random.normal(ks[7], (4 * H,), jnp.float32),
        "b_hh_b": scale * jax.random.normal(ks[8], (4 * H,), jnp.float32),
    }
    # TODO(synk): logits / CrossEntropyLoss / Softmax helpers of LeanModel are not
    # part of forward(); only embed + LSTM are implemented here.

    tokens = jax.random.randint(ks[9], (B, T), 0, VOCAB, dtype=jnp.int32)

    fwd = jax.jit(functools.partial(lean_forward, bidirectional=BIDIRECTIONAL))
    output, (h_n, c_n) = fwd(tokens, params)
    jax.block_until_ready((output, h_n, c_n))

    ref_out, (ref_h, ref_c) = _ref_forward(tokens, params, BIDIRECTIONAL)
    assert output.shape == (B, T, H * (2 if BIDIRECTIONAL else 1))
    assert h_n.shape == ((2 if BIDIRECTIONAL else 1), B, H)
    assert jnp.allclose(output, ref_out, atol=1e-5), "output mismatch"
    assert jnp.allclose(h_n, ref_h, atol=1e-5), "h_n mismatch"
    assert jnp.allclose(c_n, ref_c, atol=1e-5), "c_n mismatch"

    print("KERNEL_OK")
</pallas_src>

<mosaic_0001>
module attributes {stable_mosaic.version = 11 : i64} {
  func.func @_fused_lstm_kernel(%arg0: memref<8x8x256xf32, #tpu.memory_space<vmem>>, %arg1: memref<64x256xf32, #tpu.memory_space<vmem>>, %arg2: memref<8x8x64xf32, #tpu.memory_space<vmem>>, %arg3: memref<2x8x32xf32, #tpu.memory_space<vmem>>, %arg4: memref<2x8x32xf32, #tpu.memory_space<vmem>>) attributes {dimension_semantics = [], scalar_prefetch = 0 : i64, scratch_operands = 0 : i64, tpu.core_type = #tpu.core_type<tc>} {
    %c0 = arith.constant 0 : index
    %c0_0 = arith.constant 0 : index
    %0 = vector.load %arg1[%c0, %c0_0] : memref<64x256xf32, #tpu.memory_space<vmem>>, vector<64x256xf32>
    %1 = tpu.iota {dimensions = array<i32: 1>} : vector<8x256xi32>
    %c64_i32 = arith.constant 64 : i32
    %c0_i32 = arith.constant 0 : i32
    %2 = arith.cmpi eq, %c64_i32, %c0_i32 : i32
    %c1_i32 = arith.constant 1 : i32
    %3 = arith.select %2, %c1_i32, %c64_i32 : i32
    %4 = vector.broadcast %3 : i32 to vector<8x256xi32>
    %5 = arith.remsi %1, %4 : vector<8x256xi32>
    %c0_i32_1 = arith.constant 0 : i32
    %6 = vector.broadcast %c0_i32_1 : i32 to vector<8x256xi32>
    %7 = arith.cmpi ne, %5, %6 : vector<8x256xi32>
    %c0_i32_2 = arith.constant 0 : i32
    %8 = vector.broadcast %c0_i32_2 : i32 to vector<8x256xi32>
    %9 = arith.cmpi slt, %5, %8 : vector<8x256xi32>
    %c0_i32_3 = arith.constant 0 : i32
    %10 = arith.cmpi slt, %3, %c0_i32_3 : i32
    %11 = vector.broadcast %10 : i1 to vector<8x256xi1>
    %12 = vector.broadcast %11 : vector<8x256xi1> to vector<8x256xi1>
    %13 = arith.xori %9, %12 : vector<8x256xi1>
    %14 = arith.andi %13, %7 : vector<8x256xi1>
    %15 = vector.broadcast %3 : i32 to vector<8x256xi32>
    %16 = arith.addi %5, %15 : vector<8x256xi32>
    %17 = arith.select %14, %16, %5 : vector<8x256xi1>, vector<8x256xi32>
    %c32_i32 = arith.constant 32 : i32
    %18 = vector.broadcast %c32_i32 : i32 to vector<8x256xi32>
    %19 = arith.cmpi slt, %17, %18 : vector<8x256xi32>
    %cst = arith.constant 0.000000e+00 : f32
    %20 = vector.broadcast %cst : f32 to vector<8x64xf32>
    %cst_4 = arith.constant 0.000000e+00 : f32
    %21 = vector.broadcast %cst_4 : f32 to vector<8x64xf32>
    %c0_5 = arith.constant 0 : index
    %c0_6 = arith.constant 0 : index
    %c0_7 = arith.constant 0 : index
    %22 = vector.load %arg0[%c0_5, %c0_6, %c0_7] : memref<8x8x256xf32, #tpu.memory_space<vmem>>, vector<1x8x256xf32>
    %23 = vector.shape_cast %22 : vector<1x8x256xf32> to vector<8x256xf32>
    %c7 = arith.constant 7 : index
    %c0_8 = arith.constant 0 : index
    %c0_9 = arith.constant 0 : index
    %24 = vector.load %arg0[%c7, %c0_8, %c0_9] : memref<8x8x256xf32, #tpu.memory_space<vmem>>, vector<1x8x256xf32>
    %25 = vector.shape_cast %24 : vector<1x8x256xf32> to vector<8x256xf32>
    %26 = arith.select %19, %23, %25 : vector<8x256xi1>, vector<8x256xf32>
    %cst_10 = arith.constant dense<0.000000e+00> : vector<8x256xf32>
    %27 = tpu.matmul %20, %0, %cst_10 {dimension_numbers = #tpu.dot_dimension_numbers<[1], [0], [0], [1], [0, 0, 1, 1], [], []>} : vector<8x64xf32>, vector<64x256xf32>, vector<8x256xf32> -> vector<8x256xf32>
    %28 = arith.addf %26, %27 : vector<8x256xf32>
    %29 = arith.negf %28 : vector<8x256xf32>
    %30 = math.exp %29 : vector<8x256xf32>
    %cst_11 = arith.constant 1.000000e+00 : f32
    %31 = vector.broadcast %cst_11 : f32 to vector<8x256xf32>
    %32 = arith.addf %31, %30 : vector<8x256xf32>
    %33 = arith.divf %31, %32 : vector<8x256xf32>
    %34 = math.tanh %28 : vector<8x256xf32>
    %35 = vector.extract_strided_slice %33 {offsets = [0, 0], sizes = [8, 64], strides = [1, 1]} : vector<8x256xf32> to vector<8x64xf32>
    %36 = vector.extract_strided_slice %33 {offsets = [0, 64], sizes = [8, 64], strides = [1, 1]} : vector<8x256xf32> to vector<8x64xf32>
    %37 = vector.extract_strided_slice %34 {offsets = [0, 128], sizes = [8, 64], strides = [1, 1]} : vector<8x256xf32> to vector<8x64xf32>
    %38 = vector.extract_strided_slice %33 {offsets = [0, 192], sizes = [8, 64], strides = [1, 1]} : vector<8x256xf32> to vector<8x64xf32>
    %39 = arith.mulf %36, %21 : vector<8x64xf32>
    %40 = arith.mulf %35, %37 : vector<8x64xf32>
    %41 = arith.addf %39, %40 : vector<8x64xf32>
    %42 = math.tanh %41 : vector<8x64xf32>
    %43 = arith.mulf %38, %42 : vector<8x64xf32>
    %44 = vector.extract_strided_slice %43 {offsets = [0, 0], sizes = [8, 32], strides = [1, 1]} : vector<8x64xf32> to vector<8x32xf32>
    %c0_12 = arith.constant 0 : index
    %c0_13 = arith.constant 0 : index
    %c0_14 = arith.constant 0 : index
    %45 = vector.load %arg2[%c0_12, %c0_13, %c0_14] : memref<8x8x64xf32, #tpu.memory_space<vmem>>, vector<1x8x32xf32>
    %46 = vector.shape_cast %45 : vector<1x8x32xf32> to vector<8x32xf32>
    %47 = vector.shape_cast %44 : vector<8x32xf32> to vector<1x8x32xf32>
    tpu.vector_store %arg2[%c0_12, %c0_13, %c0_14], %47 {strides = array<i32>} : memref<8x8x64xf32, #tpu.memory_space<vmem>>, vector<1x8x32xf32>,
    %48 = vector.extract_strided_slice %43 {offsets = [0, 32], sizes = [8, 32], strides = [1, 1]} : vector<8x64xf32> to vector<8x32xf32>
    %c7_15 = arith.constant 7 : index
    %c0_16 = arith.constant 0 : index
    %c32 = arith.constant 32 : index
    %49 = vector.load %arg2[%c7_15, %c0_16, %c32] : memref<8x8x64xf32, #tpu.memory_space<vmem>>, vector<1x8x32xf32>
    %50 = vector.shape_cast %49 : vector<1x8x32xf32> to vector<8x32xf32>
    %51 = vector.shape_cast %48 : vector<8x32xf32> to vector<1x8x32xf32>
    tpu.vector_store %arg2[%c7_15, %c0_16, %c32], %51 {strides = array<i32>} : memref<8x8x64xf32, #tpu.memory_space<vmem>>, vector<1x8x32xf32>,
    %c1 = arith.constant 1 : index
    %c0_17 = arith.constant 0 : index
    %c0_18 = arith.constant 0 : index
    %52 = vector.load %arg0[%c1, %c0_17, %c0_18] : memref<8x8x256xf32, #tpu.memory_space<vmem>>, vector<1x8x256xf32>
    %53 = vector.shape_cast %52 : vector<1x8x256xf32> to vector<8x256xf32>
    %c6 = arith.constant 6 : index
    %c0_19 = arith.constant 0 : index
    %c0_20 = arith.constant 0 : index
    %54 = vector.load %arg0[%c6, %c0_19, %c0_20] : memref<8x8x256xf32, #tpu.memory_space<vmem>>, vector<1x8x256xf32>
    %55 = vector.shape_cast %54 : vector<1x8x256xf32> to vector<8x256xf32>
    %56 = arith.select %19, %53, %55 : vector<8x256xi1>, vector<8x256xf32>
    %cst_21 = arith.constant dense<0.000000e+00> : vector<8x256xf32>
    %57 = tpu.matmul %43, %0, %cst_21 {dimension_numbers = #tpu.dot_dimension_numbers<[1], [0], [0], [1], [0, 0, 1, 1], [], []>} : vector<8x64xf32>, vector<64x256xf32>, vector<8x256xf32> -> vector<8x256xf32>
    %58 = arith.addf %56, %57 : vector<8x256xf32>
    %59 = arith.negf %58 : vector<8x256xf32>
    %60 = math.exp %59 : vector<8x256xf32>
    %cst_22 = arith.constant 1.000000e+00 : f32
    %61 = vector.broadcast %cst_22 : f32 to vector<8x256xf32>
    %62 = arith.addf %61, %60 : vector<8x256xf32>
    %63 = arith.divf %61, %62 : vector<8x256xf32>
    %64 = math.tanh %58 : vector<8x256xf32>
    %65 = vector.extract_strided_slice %63 {offsets = [0, 0], sizes = [8, 64], strides = [1, 1]} : vector<8x256xf32> to vector<8x64xf32>
    %66 = vector.extract_strided_slice %63 {offsets = [0, 64], sizes = [8, 64], strides = [1, 1]} : vector<8x256xf32> to vector<8x64xf32>
    %67 = vector.extract_strided_slice %64 {offsets = [0, 128], sizes = [8, 64], strides = [1, 1]} : vector<8x256xf32> to vector<8x64xf32>
    %68 = vector.extract_strided_slice %63 {offsets = [0, 192], sizes = [8, 64], strides = [1, 1]} : vector<8x256xf32> to vector<8x64xf32>
    %69 = arith.mulf %66, %41 : vector<8x64xf32>
    %70 = arith.mulf %65, %67 : vector<8x64xf32>
    %71 = arith.addf %69, %70 : vector<8x64xf32>
    %72 = math.tanh %71 : vector<8x64xf32>
    %73 = arith.mulf %68, %72 : vector<8x64xf32>
    %74 = vector.extract_strided_slice %73 {offsets = [0, 0], sizes = [8, 32], strides = [1, 1]} : vector<8x64xf32> to vector<8x32xf32>
    %c1_23 = arith.constant 1 : index
    %c0_24 = arith.constant 0 : index
    %c0_25 = arith.constant 0 : index
    %75 = vector.load %arg2[%c1_23, %c0_24, %c0_25] : memref<8x8x64xf32, #tpu.memory_space<vmem>>, vector<1x8x32xf32>
    %76 = vector.shape_cast %75 : vector<1x8x32xf32> to vector<8x32xf32>
    %77 = vector.shape_cast %74 : vector<8x32xf32> to vector<1x8x32xf32>
    tpu.vector_store %arg2[%c1_23, %c0_24, %c0_25], %77 {strides = array<i32>} : memref<8x8x64xf32, #tpu.memory_space<vmem>>, vector<1x8x32xf32>,
    %78 = vector.extract_strided_slice %73 {offsets = [0, 32], sizes = [8, 32], strides = [1, 1]} : vector<8x64xf32> to vector<8x32xf32>
    %c6_26 = arith.constant 6 : index
    %c0_27 = arith.constant 0 : index
    %c32_28 = arith.constant 32 : index
    %79 = vector.load %arg2[%c6_26, %c0_27, %c32_28] : memref<8x8x64xf32, #tpu.memory_space<vmem>>, vector<1x8x32xf32>
    %80 = vector.shape_cast %79 : vector<1x8x32xf32> to vector<8x32xf32>
    %81 = vector.shape_cast %78 : vector<8x32xf32> to vector<1x8x32xf32>
    tpu.vector_store %arg2[%c6_26, %c0_27, %c32_28], %81 {strides = array<i32>} : memref<8x8x64xf32, #tpu.memory_space<vmem>>, vector<1x8x32xf32>,
    %c2 = arith.constant 2 : index
    %c0_29 = arith.constant 0 : index
    %c0_30 = arith.constant 0 : index
    %82 = vector.load %arg0[%c2, %c0_29, %c0_30] : memref<8x8x256xf32, #tpu.memory_space<vmem>>, vector<1x8x256xf32>
    %83 = vector.shape_cast %82 : vector<1x8x256xf32> to vector<8x256xf32>
    %c5 = arith.constant 5 : index
    %c0_31 = arith.constant 0 : index
    %c0_32 = arith.constant 0 : index
    %84 = vector.load %arg0[%c5, %c0_31, %c0_32] : memref<8x8x256xf32, #tpu.memory_space<vmem>>, vector<1x8x256xf32>
    %85 = vector.shape_cast %84 : vector<1x8x256xf32> to vector<8x256xf32>
    %86 = arith.select %19, %83, %85 : vector<8x256xi1>, vector<8x256xf32>
    %cst_33 = arith.constant dense<0.000000e+00> : vector<8x256xf32>
    %87 = tpu.matmul %73, %0, %cst_33 {dimension_numbers = #tpu.dot_dimension_numbers<[1], [0], [0], [1], [0, 0, 1, 1], [], []>} : vector<8x64xf32>, vector<64x256xf32>, vector<8x256xf32> -> vector<8x256xf32>
    %88 = arith.addf %86, %87 : vector<8x256xf32>
    %89 = arith.negf %88 : vector<8x256xf32>
    %90 = math.exp %89 : vector<8x256xf32>
    %cst_34 = arith.constant 1.000000e+00 : f32
    %91 = vector.broadcast %cst_34 : f32 to vector<8x256xf32>
    %92 = arith.addf %91, %90 : vector<8x256xf32>
    %93 = arith.divf %91, %92 : vector<8x256xf32>
    %94 = math.tanh %88 : vector<8x256xf32>
    %95 = vector.extract_strided_slice %93 {offsets = [0, 0], sizes = [8, 64], strides = [1, 1]} : vector<8x256xf32> to vector<8x64xf32>
    %96 = vector.extract_strided_slice %93 {offsets = [0, 64], sizes = [8, 64], strides = [1, 1]} : vector<8x256xf32> to vector<8x64xf32>
    %97 = vector.extract_strided_slice %94 {offsets = [0, 128], sizes = [8, 64], strides = [1, 1]} : vector<8x256xf32> to vector<8x64xf32>
    %98 = vector.extract_strided_slice %93 {offsets = [0, 192], sizes = [8, 64], strides = [1, 1]} : vector<8x256xf32> to vector<8x64xf32>
    %99 = arith.mulf %96, %71 : vector<8x64xf32>
    %100 = arith.mulf %95, %97 : vector<8x64xf32>
    %101 = arith.addf %99, %100 : vector<8x64xf32>
    %102 = math.tanh %101 : vector<8x64xf32>
    %103 = arith.mulf %98, %102 : vector<8x64xf32>
    %104 = vector.extract_strided_slice %103 {offsets = [0, 0], sizes = [8, 32], strides = [1, 1]} : vector<8x64xf32> to vector<8x32xf32>
    %c2_35 = arith.constant 2 : index
    %c0_36 = arith.constant 0 : index
    %c0_37 = arith.constant 0 : index
    %105 = vector.load %arg2[%c2_35, %c0_36, %c0_37] : memref<8x8x64xf32, #tpu.memory_space<vmem>>, vector<1x8x32xf32>
    %106 = vector.shape_cast %105 : vector<1x8x32xf32> to vector<8x32xf32>
    %107 = vector.shape_cast %104 : vector<8x32xf32> to vector<1x8x32xf32>
    tpu.vector_store %arg2[%c2_35, %c0_36, %c0_37], %107 {strides = array<i32>} : memref<8x8x64xf32, #tpu.memory_space<vmem>>, vector<1x8x32xf32>,
    %108 = vector.extract_strided_slice %103 {offsets = [0, 32], sizes = [8, 32], strides = [1, 1]} : vector<8x64xf32> to vector<8x32xf32>
    %c5_38 = arith.constant 5 : index
    %c0_39 = arith.constant 0 : index
    %c32_40 = arith.constant 32 : index
    %109 = vector.load %arg2[%c5_38, %c0_39, %c32_40] : memref<8x8x64xf32, #tpu.memory_space<vmem>>, vector<1x8x32xf32>
    %110 = vector.shape_cast %109 : vector<1x8x32xf32> to vector<8x32xf32>
    %111 = vector.shape_cast %108 : vector<8x32xf32> to vector<1x8x32xf32>
    tpu.vector_store %arg2[%c5_38, %c0_39, %c32_40], %111 {strides = array<i32>} : memref<8x8x64xf32, #tpu.memory_space<vmem>>, vector<1x8x32xf32>,
    %c3 = arith.constant 3 : index
    %c0_41 = arith.constant 0 : index
    %c0_42 = arith.constant 0 : index
    %112 = vector.load %arg0[%c3, %c0_41, %c0_42] : memref<8x8x256xf32, #tpu.memory_space<vmem>>, vector<1x8x256xf32>
    %113 = vector.shape_cast %112 : vector<1x8x256xf32> to vector<8x256xf32>
    %c4 = arith.constant 4 : index
    %c0_43 = arith.constant 0 : index
    %c0_44 = arith.constant 0 : index
    %114 = vector.load %arg0[%c4, %c0_43, %c0_44] : memref<8x8x256xf32, #tpu.memory_space<vmem>>, vector<1x8x256xf32>
    %115 = vector.shape_cast %114 : vector<1x8x256xf32> to vector<8x256xf32>
    %116 = arith.select %19, %113, %115 : vector<8x256xi1>, vector<8x256xf32>
    %cst_45 = arith.constant dense<0.000000e+00> : vector<8x256xf32>
    %117 = tpu.matmul %103, %0, %cst_45 {dimension_numbers = #tpu.dot_dimension_numbers<[1], [0], [0], [1], [0, 0, 1, 1], [], []>} : vector<8x64xf32>, vector<64x256xf32>, vector<8x256xf32> -> vector<8x256xf32>
    %118 = arith.addf %116, %117 : vector<8x256xf32>
    %119 = arith.negf %118 : vector<8x256xf32>
    %120 = math.exp %119 : vector<8x256xf32>
    %cst_46 = arith.constant 1.000000e+00 : f32
    %121 = vector.broadcast %cst_46 : f32 to vector<8x256xf32>
    %122 = arith.addf %121, %120 : vector<8x256xf32>
    %123 = arith.divf %121, %122 : vector<8x256xf32>
    %124 = math.tanh %118 : vector<8x256xf32>
    %125 = vector.extract_strided_slice %123 {offsets = [0, 0], sizes = [8, 64], strides = [1, 1]} : vector<8x256xf32> to vector<8x64xf32>
    %126 = vector.extract_strided_slice %123 {offsets = [0, 64], sizes = [8, 64], strides = [1, 1]} : vector<8x256xf32> to vector<8x64xf32>
    %127 = vector.extract_strided_slice %124 {offsets = [0, 128], sizes = [8, 64], strides = [1, 1]} : vector<8x256xf32> to vector<8x64xf32>
    %128 = vector.extract_strided_slice %123 {offsets = [0, 192], sizes = [8, 64], strides = [1, 1]} : vector<8x256xf32> to vector<8x64xf32>
    %129 = arith.mulf %126, %101 : vector<8x64xf32>
    %130 = arith.mulf %125, %127 : vector<8x64xf32>
    %131 = arith.addf %129, %130 : vector<8x64xf32>
    %132 = math.tanh %131 : vector<8x64xf32>
    %133 = arith.mulf %128, %132 : vector<8x64xf32>
    %134 = vector.extract_strided_slice %133 {offsets = [0, 0], sizes = [8, 32], strides = [1, 1]} : vector<8x64xf32> to vector<8x32xf32>
    %c3_47 = arith.constant 3 : index
    %c0_48 = arith.constant 0 : index
    %c0_49 = arith.constant 0 : index
    %135 = vector.load %arg2[%c3_47, %c0_48, %c0_49] : memref<8x8x64xf32, #tpu.memory_space<vmem>>, vector<1x8x32xf32>
    %136 = vector.shape_cast %135 : vector<1x8x32xf32> to vector<8x32xf32>
    %137 = vector.shape_cast %134 : vector<8x32xf32> to vector<1x8x32xf32>
    tpu.vector_store %arg2[%c3_47, %c0_48, %c0_49], %137 {strides = array<i32>} : memref<8x8x64xf32, #tpu.memory_space<vmem>>, vector<1x8x32xf32>,
    %138 = vector.extract_strided_slice %133 {offsets = [0, 32], sizes = [8, 32], strides = [1, 1]} : vector<8x64xf32> to vector<8x32xf32>
    %c4_50 = arith.constant 4 : index
    %c0_51 = arith.constant 0 : index
    %c32_52 = arith.constant 32 : index
    %139 = vector.load %arg2[%c4_50, %c0_51, %c32_52] : memref<8x8x64xf32, #tpu.memory_space<vmem>>, vector<1x8x32xf32>
    %140 = vector.shape_cast %139 : vector<1x8x32xf32> to vector<8x32xf32>
    %141 = vector.shape_cast %138 : vector<8x32xf32> to vector<1x8x32xf32>
    tpu.vector_store %arg2[%c4_50, %c0_51, %c32_52], %141 {strides = array<i32>} : memref<8x8x64xf32, #tpu.memory_space<vmem>>, vector<1x8x32xf32>,
    %c4_53 = arith.constant 4 : index
    %c0_54 = arith.constant 0 : index
    %c0_55 = arith.constant 0 : index
    %142 = vector.load %arg0[%c4_53, %c0_54, %c0_55] : memref<8x8x256xf32, #tpu.memory_space<vmem>>, vector<1x8x256xf32>
    %143 = vector.shape_cast %142 : vector<1x8x256xf32> to vector<8x256xf32>
    %c3_56 = arith.constant 3 : index
    %c0_57 = arith.constant 0 : index
    %c0_58 = arith.constant 0 : index
    %144 = vector.load %arg0[%c3_56, %c0_57, %c0_58] : memref<8x8x256xf32, #tpu.memory_space<vmem>>, vector<1x8x256xf32>
    %145 = vector.shape_cast %144 : vector<1x8x256xf32> to vector<8x256xf32>
    %146 = arith.select %19, %143, %145 : vector<8x256xi1>, vector<8x256xf32>
    %cst_59 = arith.constant dense<0.000000e+00> : vector<8x256xf32>
    %147 = tpu.matmul %133, %0, %cst_59 {dimension_numbers = #tpu.dot_dimension_numbers<[1], [0], [0], [1], [0, 0, 1, 1], [], []>} : vector<8x64xf32>, vector<64x256xf32>, vector<8x256xf32> -> vector<8x256xf32>
    %148 = arith.addf %146, %147 : vector<8x256xf32>
    %149 = arith.negf %148 : vector<8x256xf32>
    %150 = math.exp %149 : vector<8x256xf32>
    %cst_60 = arith.constant 1.000000e+00 : f32
    %151 = vector.broadcast %cst_60 : f32 to vector<8x256xf32>
    %152 = arith.addf %151, %150 : vector<8x256xf32>
    %153 = arith.divf %151, %152 : vector<8x256xf32>
    %154 = math.tanh %148 : vector<8x256xf32>
    %155 = vector.extract_strided_slice %153 {offsets = [0, 0], sizes = [8, 64], strides = [1, 1]} : vector<8x256xf32> to vector<8x64xf32>
    %156 = vector.extract_strided_slice %153 {offsets = [0, 64], sizes = [8, 64], strides = [1, 1]} : vector<8x256xf32> to vector<8x64xf32>
    %157 = vector.extract_strided_slice %154 {offsets = [0, 128], sizes = [8, 64], strides = [1, 1]} : vector<8x256xf32> to vector<8x64xf32>
    %158 = vector.extract_strided_slice %153 {offsets = [0, 192], sizes = [8, 64], strides = [1, 1]} : vector<8x256xf32> to vector<8x64xf32>
    %159 = arith.mulf %156, %131 : vector<8x64xf32>
    %160 = arith.mulf %155, %157 : vector<8x64xf32>
    %161 = arith.addf %159, %160 : vector<8x64xf32>
    %162 = math.tanh %161 : vector<8x64xf32>
    %163 = arith.mulf %158, %162 : vector<8x64xf32>
    %164 = vector.extract_strided_slice %163 {offsets = [0, 0], sizes = [8, 32], strides = [1, 1]} : vector<8x64xf32> to vector<8x32xf32>
    %c4_61 = arith.constant 4 : index
    %c0_62 = arith.constant 0 : index
    %c0_63 = arith.constant 0 : index
    %165 = vector.load %arg2[%c4_61, %c0_62, %c0_63] : memref<8x8x64xf32, #tpu.memory_space<vmem>>, vector<1x8x32xf32>
    %166 = vector.shape_cast %165 : vector<1x8x32xf32> to vector<8x32xf32>
    %167 = vector.shape_cast %164 : vector<8x32xf32> to vector<1x8x32xf32>
    tpu.vector_store %arg2[%c4_61, %c0_62, %c0_63], %167 {strides = array<i32>} : memref<8x8x64xf32, #tpu.memory_space<vmem>>, vector<1x8x32xf32>,
    %168 = vector.extract_strided_slice %163 {offsets = [0, 32], sizes = [8, 32], strides = [1, 1]} : vector<8x64xf32> to vector<8x32xf32>
    %c3_64 = arith.constant 3 : index
    %c0_65 = arith.constant 0 : index
    %c32_66 = arith.constant 32 : index
    %169 = vector.load %arg2[%c3_64, %c0_65, %c32_66] : memref<8x8x64xf32, #tpu.memory_space<vmem>>, vector<1x8x32xf32>
    %170 = vector.shape_cast %169 : vector<1x8x32xf32> to vector<8x32xf32>
    %171 = vector.shape_cast %168 : vector<8x32xf32> to vector<1x8x32xf32>
    tpu.vector_store %arg2[%c3_64, %c0_65, %c32_66], %171 {strides = array<i32>} : memref<8x8x64xf32, #tpu.memory_space<vmem>>, vector<1x8x32xf32>,
    %c5_67 = arith.constant 5 : index
    %c0_68 = arith.constant 0 : index
    %c0_69 = arith.constant 0 : index
    %172 = vector.load %arg0[%c5_67, %c0_68, %c0_69] : memref<8x8x256xf32, #tpu.memory_space<vmem>>, vector<1x8x256xf32>
    %173 = vector.shape_cast %172 : vector<1x8x256xf32> to vector<8x256xf32>
    %c2_70 = arith.constant 2 : index
    %c0_71 = arith.constant 0 : index
    %c0_72 = arith.constant 0 : index
    %174 = vector.load %arg0[%c2_70, %c0_71, %c0_72] : memref<8x8x256xf32, #tpu.memory_space<vmem>>, vector<1x8x256xf32>
    %175 = vector.shape_cast %174 : vector<1x8x256xf32> to vector<8x256xf32>
    %176 = arith.select %19, %173, %175 : vector<8x256xi1>, vector<8x256xf32>
    %cst_73 = arith.constant dense<0.000000e+00> : vector<8x256xf32>
    %177 = tpu.matmul %163, %0, %cst_73 {dimension_numbers = #tpu.dot_dimension_numbers<[1], [0], [0], [1], [0, 0, 1, 1], [], []>} : vector<8x64xf32>, vector<64x256xf32>, vector<8x256xf32> -> vector<8x256xf32>
    %178 = arith.addf %176, %177 : vector<8x256xf32>
    %179 = arith.negf %178 : vector<8x256xf32>
    %180 = math.exp %179 : vector<8x256xf32>
    %cst_74 = arith.constant 1.000000e+00 : f32
    %181 = vector.broadcast %cst_74 : f32 to vector<8x256xf32>
    %182 = arith.addf %181, %180 : vector<8x256xf32>
    %183 = arith.divf %181, %182 : vector<8x256xf32>
    %184 = math.tanh %178 : vector<8x256xf32>
    %185 = vector.extract_strided_slice %183 {offsets = [0, 0], sizes = [8, 64], strides = [1, 1]} : vector<8x256xf32> to vector<8x64xf32>
    %186 = vector.extract_strided_slice %183 {offsets = [0, 64], sizes = [8, 64], strides = [1, 1]} : vector<8x256xf32> to vector<8x64xf32>
    %187 = vector.extract_strided_slice %184 {offsets = [0, 128], sizes = [8, 64], strides = [1, 1]} : vector<8x256xf32> to vector<8x64xf32>
    %188 = vector.extract_strided_slice %183 {offsets = [0, 192], sizes = [8, 64], strides = [1, 1]} : vector<8x256xf32> to vector<8x64xf32>
    %189 = arith.mulf %186, %161 : vector<8x64xf32>
    %190 = arith.mulf %185, %187 : vector<8x64xf32>
    %191 = arith.addf %189, %190 : vector<8x64xf32>
    %192 = math.tanh %191 : vector<8x64xf32>
    %193 = arith.mulf %188, %192 : vector<8x64xf32>
    %194 = vector.extract_strided_slice %193 {offsets = [0, 0], sizes = [8, 32], strides = [1, 1]} : vector<8x64xf32> to vector<8x32xf32>
    %c5_75 = arith.constant 5 : index
    %c0_76 = arith.constant 0 : index
    %c0_77 = arith.constant 0 : index
    %195 = vector.load %arg2[%c5_75, %c0_76, %c0_77] : memref<8x8x64xf32, #tpu.memory_space<vmem>>, vector<1x8x32xf32>
    %196 = vector.shape_cast %195 : vector<1x8x32xf32> to vector<8x32xf32>
    %197 = vector.shape_cast %194 : vector<8x32xf32> to vector<1x8x32xf32>
    tpu.vector_store %arg2[%c5_75, %c0_76, %c0_77], %197 {strides = array<i32>} : memref<8x8x64xf32, #tpu.memory_space<vmem>>, vector<1x8x32xf32>,
    %198 = vector.extract_strided_slice %193 {offsets = [0, 32], sizes = [8, 32], strides = [1, 1]} : vector<8x64xf32> to vector<8x32xf32>
    %c2_78 = arith.constant 2 : index
    %c0_79 = arith.constant 0 : index
    %c32_80 = arith.constant 32 : index
    %199 = vector.load %arg2[%c2_78, %c0_79, %c32_80] : memref<8x8x64xf32, #tpu.memory_space<vmem>>, vector<1x8x32xf32>
    %200 = vector.shape_cast %199 : vector<1x8x32xf32> to vector<8x32xf32>
    %201 = vector.shape_cast %198 : vector<8x32xf32> to vector<1x8x32xf32>
    tpu.vector_store %arg2[%c2_78, %c0_79, %c32_80], %201 {strides = array<i32>} : memref<8x8x64xf32, #tpu.memory_space<vmem>>, vector<1x8x32xf32>,
    %c6_81 = arith.constant 6 : index
    %c0_82 = arith.constant 0 : index
    %c0_83 = arith.constant 0 : index
    %202 = vector.load %arg0[%c6_81, %c0_82, %c0_83] : memref<8x8x256xf32, #tpu.memory_space<vmem>>, vector<1x8x256xf32>
    %203 = vector.shape_cast %202 : vector<1x8x256xf32> to vector<8x256xf32>
    %c1_84 = arith.constant 1 : index
    %c0_85 = arith.constant 0 : index
    %c0_86 = arith.constant 0 : index
    %204 = vector.load %arg0[%c1_84, %c0_85, %c0_86] : memref<8x8x256xf32, #tpu.memory_space<vmem>>, vector<1x8x256xf32>
    %205 = vector.shape_cast %204 : vector<1x8x256xf32> to vector<8x256xf32>
    %206 = arith.select %19, %203, %205 : vector<8x256xi1>, vector<8x256xf32>
    %cst_87 = arith.constant dense<0.000000e+00> : vector<8x256xf32>
    %207 = tpu.matmul %193, %0, %cst_87 {dimension_numbers = #tpu.dot_dimension_numbers<[1], [0], [0], [1], [0, 0, 1, 1], [], []>} : vector<8x64xf32>, vector<64x256xf32>, vector<8x256xf32> -> vector<8x256xf32>
    %208 = arith.addf %206, %207 : vector<8x256xf32>
    %209 = arith.negf %208 : vector<8x256xf32>
    %210 = math.exp %209 : vector<8x256xf32>
    %cst_88 = arith.constant 1.000000e+00 : f32
    %211 = vector.broadcast %cst_88 : f32 to vector<8x256xf32>
    %212 = arith.addf %211, %210 : vector<8x256xf32>
    %213 = arith.divf %211, %212 : vector<8x256xf32>
    %214 = math.tanh %208 : vector<8x256xf32>
    %215 = vector.extract_strided_slice %213 {offsets = [0, 0], sizes = [8, 64], strides = [1, 1]} : vector<8x256xf32> to vector<8x64xf32>
    %216 = vector.extract_strided_slice %213 {offsets = [0, 64], sizes = [8, 64], strides = [1, 1]} : vector<8x256xf32> to vector<8x64xf32>
    %217 = vector.extract_strided_slice %214 {offsets = [0, 128], sizes = [8, 64], strides = [1, 1]} : vector<8x256xf32> to vector<8x64xf32>
    %218 = vector.extract_strided_slice %213 {offsets = [0, 192], sizes = [8, 64], strides = [1, 1]} : vector<8x256xf32> to vector<8x64xf32>
    %219 = arith.mulf %216, %191 : vector<8x64xf32>
    %220 = arith.mulf %215, %217 : vector<8x64xf32>
    %221 = arith.addf %219, %220 : vector<8x64xf32>
    %222 = math.tanh %221 : vector<8x64xf32>
    %223 = arith.mulf %218, %222 : vector<8x64xf32>
    %224 = vector.extract_strided_slice %223 {offsets = [0, 0], sizes = [8, 32], strides = [1, 1]} : vector<8x64xf32> to vector<8x32xf32>
    %c6_89 = arith.constant 6 : index
    %c0_90 = arith.constant 0 : index
    %c0_91 = arith.constant 0 : index
    %225 = vector.load %arg2[%c6_89, %c0_90, %c0_91] : memref<8x8x64xf32, #tpu.memory_space<vmem>>, vector<1x8x32xf32>
    %226 = vector.shape_cast %225 : vector<1x8x32xf32> to vector<8x32xf32>
    %227 = vector.shape_cast %224 : vector<8x32xf32> to vector<1x8x32xf32>
    tpu.vector_store %arg2[%c6_89, %c0_90, %c0_91], %227 {strides = array<i32>} : memref<8x8x64xf32, #tpu.memory_space<vmem>>, vector<1x8x32xf32>,
    %228 = vector.extract_strided_slice %223 {offsets = [0, 32], sizes = [8, 32], strides = [1, 1]} : vector<8x64xf32> to vector<8x32xf32>
    %c1_92 = arith.constant 1 : index
    %c0_93 = arith.constant 0 : index
    %c32_94 = arith.constant 32 : index
    %229 = vector.load %arg2[%c1_92, %c0_93, %c32_94] : memref<8x8x64xf32, #tpu.memory_space<vmem>>, vector<1x8x32xf32>
    %230 = vector.shape_cast %229 : vector<1x8x32xf32> to vector<8x32xf32>
    %231 = vector.shape_cast %228 : vector<8x32xf32> to vector<1x8x32xf32>
    tpu.vector_store %arg2[%c1_92, %c0_93, %c32_94], %231 {strides = array<i32>} : memref<8x8x64xf32, #tpu.memory_space<vmem>>, vector<1x8x32xf32>,
    %c7_95 = arith.constant 7 : index
    %c0_96 = arith.constant 0 : index
    %c0_97 = arith.constant 0 : index
    %232 = vector.load %arg0[%c7_95, %c0_96, %c0_97] : memref<8x8x256xf32, #tpu.memory_space<vmem>>, vector<1x8x256xf32>
    %233 = vector.shape_cast %232 : vector<1x8x256xf32> to vector<8x256xf32>
    %c0_98 = arith.constant 0 : index
    %c0_99 = arith.constant 0 : index
    %c0_100 = arith.constant 0 : index
    %234 = vector.load %arg0[%c0_98, %c0_99, %c0_100] : memref<8x8x256xf32, #tpu.memory_space<vmem>>, vector<1x8x256xf32>
    %235 = vector.shape_cast %234 : vector<1x8x256xf32> to vector<8x256xf32>
    %236 = arith.select %19, %233, %235 : vector<8x256xi1>, vector<8x256xf32>
    %cst_101 = arith.constant dense<0.000000e+00> : vector<8x256xf32>
    %237 = tpu.matmul %223, %0, %cst_101 {dimension_numbers = #tpu.dot_dimension_numbers<[1], [0], [0], [1], [0, 0, 1, 1], [], []>} : vector<8x64xf32>, vector<64x256xf32>, vector<8x256xf32> -> vector<8x256xf32>
    %238 = arith.addf %236, %237 : vector<8x256xf32>
    %239 = arith.negf %238 : vector<8x256xf32>
    %240 = math.exp %239 : vector<8x256xf32>
    %cst_102 = arith.constant 1.000000e+00 : f32
    %241 = vector.broadcast %cst_102 : f32 to vector<8x256xf32>
    %242 = arith.addf %241, %240 : vector<8x256xf32>
    %243 = arith.divf %241, %242 : vector<8x256xf32>
    %244 = math.tanh %238 : vector<8x256xf32>
    %245 = vector.extract_strided_slice %243 {offsets = [0, 0], sizes = [8, 64], strides = [1, 1]} : vector<8x256xf32> to vector<8x64xf32>
    %246 = vector.extract_strided_slice %243 {offsets = [0, 64], sizes = [8, 64], strides = [1, 1]} : vector<8x256xf32> to vector<8x64xf32>
    %247 = vector.extract_strided_slice %244 {offsets = [0, 128], sizes = [8, 64], strides = [1, 1]} : vector<8x256xf32> to vector<8x64xf32>
    %248 = vector.extract_strided_slice %243 {offsets = [0, 192], sizes = [8, 64], strides = [1, 1]} : vector<8x256xf32> to vector<8x64xf32>
    %249 = arith.mulf %246, %221 : vector<8x64xf32>
    %250 = arith.mulf %245, %247 : vector<8x64xf32>
    %251 = arith.addf %249, %250 : vector<8x64xf32>
    %252 = math.tanh %251 : vector<8x64xf32>
    %253 = arith.mulf %248, %252 : vector<8x64xf32>
    %254 = vector.extract_strided_slice %253 {offsets = [0, 0], sizes = [8, 32], strides = [1, 1]} : vector<8x64xf32> to vector<8x32xf32>
    %c7_103 = arith.constant 7 : index
    %c0_104 = arith.constant 0 : index
    %c0_105 = arith.constant 0 : index
    %255 = vector.load %arg2[%c7_103, %c0_104, %c0_105] : memref<8x8x64xf32, #tpu.memory_space<vmem>>, vector<1x8x32xf32>
    %256 = vector.shape_cast %255 : vector<1x8x32xf32> to vector<8x32xf32>
    %257 = vector.shape_cast %254 : vector<8x32xf32> to vector<1x8x32xf32>
    tpu.vector_store %arg2[%c7_103, %c0_104, %c0_105], %257 {strides = array<i32>} : memref<8x8x64xf32, #tpu.memory_space<vmem>>, vector<1x8x32xf32>,
    %258 = vector.extract_strided_slice %253 {offsets = [0, 32], sizes = [8, 32], strides = [1, 1]} : vector<8x64xf32> to vector<8x32xf32>
    %c0_106 = arith.constant 0 : index
    %c0_107 = arith.constant 0 : index
    %c32_108 = arith.constant 32 : index
    %259 = vector.load %arg2[%c0_106, %c0_107, %c32_108] : memref<8x8x64xf32, #tpu.memory_space<vmem>>, vector<1x8x32xf32>
    %260 = vector.shape_cast %259 : vector<1x8x32xf32> to vector<8x32xf32>
    %261 = vector.shape_cast %258 : vector<8x32xf32> to vector<1x8x32xf32>
    tpu.vector_store %arg2[%c0_106, %c0_107, %c32_108], %261 {strides = array<i32>} : memref<8x8x64xf32, #tpu.memory_space<vmem>>, vector<1x8x32xf32>,
    %262 = vector.extract_strided_slice %253 {offsets = [0, 0], sizes = [8, 32], strides = [1, 1]} : vector<8x64xf32> to vector<8x32xf32>
    %c0_109 = arith.constant 0 : index
    %c0_110 = arith.constant 0 : index
    %c0_111 = arith.constant 0 : index
    %263 = vector.load %arg3[%c0_109, %c0_110, %c0_111] : memref<2x8x32xf32, #tpu.memory_space<vmem>>, vector<1x8x32xf32>
    %264 = vector.shape_cast %263 : vector<1x8x32xf32> to vector<8x32xf32>
    %265 = vector.shape_cast %262 : vector<8x32xf32> to vector<1x8x32xf32>
    tpu.vector_store %arg3[%c0_109, %c0_110, %c0_111], %265 {strides = array<i32>} : memref<2x8x32xf32, #tpu.memory_space<vmem>>, vector<1x8x32xf32>,
    %266 = vector.extract_strided_slice %251 {offsets = [0, 0], sizes = [8, 32], strides = [1, 1]} : vector<8x64xf32> to vector<8x32xf32>
    %c0_112 = arith.constant 0 : index
    %c0_113 = arith.constant 0 : index
    %c0_114 = arith.constant 0 : index
    %267 = vector.load %arg4[%c0_112, %c0_113, %c0_114] : memref<2x8x32xf32, #tpu.memory_space<vmem>>, vector<1x8x32xf32>
    %268 = vector.shape_cast %267 : vector<1x8x32xf32> to vector<8x32xf32>
    %269 = vector.shape_cast %266 : vector<8x32xf32> to vector<1x8x32xf32>
    tpu.vector_store %arg4[%c0_112, %c0_113, %c0_114], %269 {strides = array<i32>} : memref<2x8x32xf32, #tpu.memory_space<vmem>>, vector<1x8x32xf32>,
    %270 = vector.extract_strided_slice %253 {offsets = [0, 32], sizes = [8, 32], strides = [1, 1]} : vector<8x64xf32> to vector<8x32xf32>
    %c1_115 = arith.constant 1 : index
    %c0_116 = arith.constant 0 : index
    %c0_117 = arith.constant 0 : index
    %271 = vector.load %arg3[%c1_115, %c0_116, %c0_117] : memref<2x8x32xf32, #tpu.memory_space<vmem>>, vector<1x8x32xf32>
    %272 = vector.shape_cast %271 : vector<1x8x32xf32> to vector<8x32xf32>
    %273 = vector.shape_cast %270 : vector<8x32xf32> to vector<1x8x32xf32>
    tpu.vector_store %arg3[%c1_115, %c0_116, %c0_117], %273 {strides = array<i32>} : memref<2x8x32xf32, #tpu.memory_space<vmem>>, vector<1x8x32xf32>,
    %274 = vector.extract_strided_slice %251 {offsets = [0, 32], sizes = [8, 32], strides = [1, 1]} : vector<8x64xf32> to vector<8x32xf32>
    %c1_118 = arith.constant 1 : index
    %c0_119 = arith.constant 0 : index
    %c0_120 = arith.constant 0 : index
    %275 = vector.load %arg4[%c1_118, %c0_119, %c0_120] : memref<2x8x32xf32, #tpu.memory_space<vmem>>, vector<1x8x32xf32>
    %276 = vector.shape_cast %275 : vector<1x8x32xf32> to vector<8x32xf32>
    %277 = vector.shape_cast %274 : vector<8x32xf32> to vector<1x8x32xf32>
    tpu.vector_store %arg4[%c1_118, %c0_119, %c0_120], %277 {strides = array<i32>} : memref<2x8x32xf32, #tpu.memory_space<vmem>>, vector<1x8x32xf32>,
    return
  }
}

</mosaic_0001>

<llo_original>
// kernel: lean_forward.1
$region0: #{lean_forward.1}
  #allocation0 [shape = 'u32[]', space=smem, size = 0x4, offset = 0x4, fixed_abs, tag = 'smem constant byte address 0x4 - core index']
  #allocation1 [shape = 'u32[144,128]{1,0:T(1,128)}', space=vmem, size = 0x12000, scoped, tag = 'internal scratch']
  %s0 = inlined_call_operand.vmem [shape: f32[8,8,256], index: 0, kind: input, shape index: {}]
  %s1 = inlined_call_operand.vmem [shape: f32[64,256], index: 1, kind: input, shape index: {}]
  %s2 = inlined_call_operand.vmem [shape: f32[8,8,64], index: 2, kind: output, shape index: {0}]
  %s3 = inlined_call_operand.vmem [shape: f32[2,8,32], index: 3, kind: output, shape index: {1}]
  %s4 = inlined_call_operand.vmem [shape: f32[2,8,32], index: 4, kind: output, shape index: {2}]
  %5 = xla_tuple %s2, %s3, %s4
  %s6 = sld [smem:[#allocation0]]
  $region34: #{lean_forward.1} parent=0
    _
  %s8 = ssub.s32 1, %s6
  %s9 = scalar_select 0, %s8, %s6
  // Predicated region
  $region2: #{lean_forward.1} parent=0 // pred_check
    _
  $region3: #{lean_forward.1} parent=0 // pred_check_branch
    %11 = sbr.rel (0) target = $region5
  $region4: #{lean_forward.1} parent=0 // pred_region
    _
  $region5: #{lean_forward.1} parent=0 // pred_fallthru
    _
  // Predicated region
  $region6: #{lean_forward.1} parent=0 // pred_check
    _
  $region7: #{lean_forward.1} parent=0 // pred_check_branch
    %13 = sbr.rel (0) target = $region9
  $region8: #{lean_forward.1} parent=0 // pred_region
    _
  $region9: #{lean_forward.1} parent=0 // pred_fallthru
    _
  %v14 = vld [vmem:[%s1] sm:$0xff]
  %v15 = vld [vmem:[%s1 + $0x8] sm:$0xff]
  %v16 = vld [vmem:[%s1 + $0x10] sm:$0xff]
  %v17 = vld [vmem:[%s1 + $0x18] sm:$0xff]
  %v18 = vld [vmem:[%s1 + $0x20] sm:$0xff]
  %v19 = vld [vmem:[%s1 + $0x28] sm:$0xff]
  %v20 = vld [vmem:[%s1 + $0x30] sm:$0xff]
  %v21 = vld [vmem:[%s1 + $0x38] sm:$0xff]
  %v22 = vld [vmem:[%s1 + $0x40] sm:$0xff]
  %v23 = vld [vmem:[%s1 + $0x48] sm:$0xff]
  %v24 = vld [vmem:[%s1 + $0x50] sm:$0xff]
  %v25 = vld [vmem:[%s1 + $0x58] sm:$0xff]
  %v26 = vld [vmem:[%s1 + $0x60] sm:$0xff]
  %v27 = vld [vmem:[%s1 + $0x68] sm:$0xff]
  %v28 = vld [vmem:[%s1 + $0x70] sm:$0xff]
  %v29 = vld [vmem:[%s1 + $0x78] sm:$0xff]
  %v30 = vlaneseq
  %v31 = vand.u32 %v30, 127
  %v32 = vadd.s32 %v31, 128
  %vm33 = vcmp.lt.s32.totalorder %v31, 0
  %v34 = vsub.s32 0, %v31
  %v35 = vsel %vm33, %v34, %v31
  %v36 = vshrl.u32 %v35, 6
  %v37 = vand.u32 %v35, 63
  %v38 = vsub.s32 0, %v37
  %v39 = vsel %vm33, %v38, %v37
  %vm40 = vcmp.lt.s32.totalorder %v32, 0
  %v41 = vsub.s32 0, %v32
  %v42 = vsel %vm40, %v41, %v32
  %v43 = vshrl.u32 %v42, 6
  %v44 = vand.u32 %v42, 63
  %v45 = vsub.s32 0, %v44
  %v46 = vsel %vm40, %v45, %v44
  %vm47 = vcmp.ne.s32.totalorder %v39, 0
  %vm48 = vcmp.ne.s32.totalorder %v46, 0
  %vm49 = vcmp.lt.s32.totalorder %v39, 0
  %vm50 = vcmp.lt.s32.totalorder %v46, 0
  %vm51 = vmand %vm49, %vm47
  %vm52 = vmand %vm50, %vm48
  %v53 = vadd.s32 %v39, 64
  %v54 = vadd.s32 %v46, 64
  %v55 = vsel %vm51, %v53, %v39
  %v56 = vsel %vm52, %v54, %v46
  %vm57 = vcmp.lt.s32.totalorder %v55, 32
  %vm58 = vcmp.lt.s32.totalorder %v56, 32
  %v59 = vld [vmem:[%s0] sm:$0xff]
  %v60 = vld [vmem:[%s0 + $0x8] sm:$0xff]
  %s61 = scalar_lea.vmem %s0, 112
  %v62 = vld [vmem:[%s61] sm:$0xff]
  %v63 = vld [vmem:[%s61 + $0x8] sm:$0xff]
  %v64 = vsel %vm57, %v59, %v62
  %v65 = vsel %vm58, %v60, %v63
  %vm66 = vcmask 523264
  %v68 = vsel %vm66, 0.0, 0
  %70 = vmatprep.subr.mxu0 0.0
  %71 = vmatpush1.msra.mxu0 0.0
  %72 = vmatprep.subr.mxu0 0.0
  %73 = vmatpush1.msra.mxu0 0.0
  %74 = vmatprep.subr.mxu0 0.0
  %75 = vmatpush1.msra.mxu0 0.0
  %76 = vmatprep.subr.mxu0 0.0
  %77 = vmatpush1.msra.mxu0 0.0
  %78 = vmatprep.subr.mxu0 0.0
  %79 = vmatpush1.msra.mxu0 0.0
  %80 = vmatprep.subr.mxu0 0.0
  %81 = vmatpush1.msra.mxu0 0.0
  %82 = vmatprep.subr.mxu0 0.0
  %83 = vmatpush1.msra.mxu0 0.0
  %84 = vmatprep.subr.mxu0 0.0
  %85 = vmatpush1.msra.mxu0 0.0
  %86 = vmatprep.subr.mxu0 %v29
  %87 = vmatpush1.msra.mxu0 %v28
  %88 = vmatprep.subr.mxu0 %v27
  %89 = vmatpush1.msra.mxu0 %v26
  %90 = vmatprep.subr.mxu0 %v25
  %91 = vmatpush1.msra.mxu0 %v24
  %92 = vmatprep.subr.mxu0 %v23
  %93 = vmatpush1.msra.mxu0 %v22
  %94 = vmatprep.subr.mxu0 %v21
  %95 = vmatpush1.msra.mxu0 %v20
  %96 = vmatprep.subr.mxu0 %v19
  %97 = vmatpush1.msra.mxu0 %v18
  %98 = vmatprep.subr.mxu0 %v17
  %99 = vmatpush1.msra.mxu0 %v16
  %100 = vmatprep.subr.mxu0 %v15
  %101 = vmatpush1.msra.mxu0 %v14
  %102 = vmatprep.subr.mxu0 0.0
  %103 = vmatpush2.msra.mxu0 0.0
  %104 = vmatprep.subr.mxu0 0.0
  %105 = vmatpush2.msra.mxu0 0.0
  %106 = vmatprep.subr.mxu0 0.0
  %107 = vmatpush2.msra.mxu0 0.0
  %108 = vmatprep.subr.mxu0 0.0
  %109 = vmatpush2.msra.mxu0 0.0
  %110 = vmatprep.subr.mxu0 0.0
  %111 = vmatpush2.msra.mxu0 0.0
  %112 = vmatprep.subr.mxu0 0.0
  %113 = vmatpush2.msra.mxu0 0.0
  %114 = vmatprep.subr.mxu0 0.0
  %115 = vmatpush2.msra.mxu0 0.0
  %116 = vmatprep.subr.mxu0 0.0
  %117 = vmatpush2.msra.mxu0 0.0
  %118 = vmatprep.subr.mxu0 0.0
  %119 = vmatpush2.msra.mxu0 0.0
  %120 = vmatprep.subr.mxu0 0.0
  %121 = vmatpush2.msra.mxu0 0.0
  %122 = vmatprep.subr.mxu0 0.0
  %123 = vmatpush2.msra.mxu0 0.0
  %124 = vmatprep.subr.mxu0 0.0
  %125 = vmatpush2.msra.mxu0 0.0
  %126 = vmatprep.subr.mxu0 0.0
  %127 = vmatpush2.msra.mxu0 0.0
  %128 = vmatprep.subr.mxu0 0.0
  %129 = vmatpush2.msra.mxu0 0.0
  %130 = vmatprep.subr.mxu0 0.0
  %131 = vmatpush2.msra.mxu0 0.0
  %132 = vmatprep.subr.mxu0 0.0
  %133 = vmatpush2.msra.mxu0 0.0
  %134 = vmatprep.mubr.f32.mxu0 0.0
  %135 = vmatmul.mubr.f32.gmra.mxu0 %v68
  %v136 = vpop.f32.mrf.mxu0
  %v137 = vadd.f32 0.0, %v136
  %v138 = vpop.f32.mrf.mxu0
  %v139 = vadd.f32 0.0, %v138
  %140 = vdwg.mxu0
  %v141 = vadd.f32 %v64, %v137
  %v142 = vadd.f32 %v65, %v139
  %v143 = vxor.u32 %v141, 2147483648
  %v144 = vxor.u32 %v142, 2147483648
  %v145 = vmul.f32 %v143, 1.442695
  %v146 = vpow.pop %v145
  %v147 = vmul.f32 %v144, 1.442695
  %v148 = vpow.pop %v147
  %v149 = vadd.f32 %v146, 1.0
  %v150 = vadd.f32 %v148, 1.0
  %v151 = vrcp.pop %v149
  %v152 = vmul.f32 1.0, %v151
  %v153 = vrcp.pop %v150
  %v154 = vmul.f32 1.0, %v153
  %v155 = vtanh.pop %v142
  %v156 = vmul.f32 %v152, 0.0
  %v157 = vmul.f32 %v152, %v155
  %159 = vrot.lane.b32.xlu0 %v157, 64
  %v160 = vpop.permute.xlu0 %159
  %v162 = vadd.f32 %v156, %v160
  %v163 = vtanh.pop %v162
  %v164 = vmul.f32 %v154, %v163
  %166 = vrot.lane.b32.xlu0 %v164, 64
  %v167 = vpop.permute.xlu0 %166
  %vm169 = vcmask 261120
  %170 = vst.msk [vmem:[%s2] sm:$0xff] %vm169, %v167
  %s171 = scalar_lea.vmem %s2, 56
  %vm172 = vcmask 523520
  %173 = vst.msk [vmem:[%s171] sm:$0xff] %vm172, %v167
  %s174 = scalar_lea.vmem %s0, 16
  %v175 = vld [vmem:[%s174] sm:$0xff]
  %v176 = vld [vmem:[%s174 + $0x8] sm:$0xff]
  %s177 = scalar_lea.vmem %s0, 96
  %v178 = vld [vmem:[%s177] sm:$0xff]
  %v179 = vld [vmem:[%s177 + $0x8] sm:$0xff]
  %v180 = vsel %vm57, %v175, %v178
  %v181 = vsel %vm58, %v176, %v179
  %v182 = vsel %vm66, %v167, 0
  %184 = vmatprep.subr.mxu0 0.0
  %185 = vmatpush1.msra.mxu0 0.0
  %186 = vmatprep.subr.mxu0 0.0
  %187 = vmatpush1.msra.mxu0 0.0
  %188 = vmatprep.subr.mxu0 0.0
  %189 = vmatpush1.msra.mxu0 0.0
  %190 = vmatprep.subr.mxu0 0.0
  %191 = vmatpush1.msra.mxu0 0.0
  %192 = vmatprep.subr.mxu0 0.0
  %193 = vmatpush1.msra.mxu0 0.0
  %194 = vmatprep.subr.mxu0 0.0
  %195 = vmatpush1.msra.mxu0 0.0
  %196 = vmatprep.subr.mxu0 0.0
  %197 = vmatpush1.msra.mxu0 0.0
  %198 = vmatprep.subr.mxu0 0.0
  %199 = vmatpush1.msra.mxu0 0.0
  %200 = vmatprep.subr.mxu0 %v29
  %201 = vmatpush1.msra.mxu0 %v28
  %202 = vmatprep.subr.mxu0 %v27
  %203 = vmatpush1.msra.mxu0 %v26
  %204 = vmatprep.subr.mxu0 %v25
  %205 = vmatpush1.msra.mxu0 %v24
  %206 = vmatprep.subr.mxu0 %v23
  %207 = vmatpush1.msra.mxu0 %v22
  %208 = vmatprep.subr.mxu0 %v21
  %209 = vmatpush1.msra.mxu0 %v20
  %210 = vmatprep.subr.mxu0 %v19
  %211 = vmatpush1.msra.mxu0 %v18
  %212 = vmatprep.subr.mxu0 %v17
  %213 = vmatpush1.msra.mxu0 %v16
  %214 = vmatprep.subr.mxu0 %v15
  %215 = vmatpush1.msra.mxu0 %v14
  %216 = vmatprep.subr.mxu0 0.0
  %217 = vmatpush2.msra.mxu0 0.0
  %218 = vmatprep.subr.mxu0 0.0
  %219 = vmatpush2.msra.mxu0 0.0
  %220 = vmatprep.subr.mxu0 0.0
  %221 = vmatpush2.msra.mxu0 0.0
  %222 = vmatprep.subr.mxu0 0.0
  %223 = vmatpush2.msra.mxu0 0.0
  %224 = vmatprep.subr.mxu0 0.0
  %225 = vmatpush2.msra.mxu0 0.0
  %226 = vmatprep.subr.mxu0 0.0
  %227 = vmatpush2.msra.mxu0 0.0
  %228 = vmatprep.subr.mxu0 0.0
  %229 = vmatpush2.msra.mxu0 0.0
  %230 = vmatprep.subr.mxu0 0.0
  %231 = vmatpush2.msra.mxu0 0.0
  %232 = vmatprep.subr.mxu0 0.0
  %233 = vmatpush2.msra.mxu0 0.0
  %234 = vmatprep.subr.mxu0 0.0
  %235 = vmatpush2.msra.mxu0 0.0
  %236 = vmatprep.subr.mxu0 0.0
  %237 = vmatpush2.msra.mxu0 0.0
  %238 = vmatprep.subr.mxu0 0.0
  %239 = vmatpush2.msra.mxu0 0.0
  %240 = vmatprep.subr.mxu0 0.0
  %241 = vmatpush2.msra.mxu0 0.0
  %242 = vmatprep.subr.mxu0 0.0
  %243 = vmatpush2.msra.mxu0 0.0
  %244 = vmatprep.subr.mxu0 0.0
  %245 = vmatpush2.msra.mxu0 0.0
  %246 = vmatprep.subr.mxu0 0.0
  %247 = vmatpush2.msra.mxu0 0.0
  %248 = vmatprep.mubr.f32.mxu0 0.0
  %249 = vmatmul.mubr.f32.gmra.mxu0 %v182
  %v250 = vpop.f32.mrf.mxu0
  %v251 = vadd.f32 0.0, %v250
  %v252 = vpop.f32.mrf.mxu0
  %v253 = vadd.f32 0.0, %v252
  %254 = vdwg.mxu0
  %v255 = vadd.f32 %v180, %v251
  %v256 = vadd.f32 %v181, %v253
  %v257 = vxor.u32 %v255, 2147483648
  %v258 = vxor.u32 %v256, 2147483648
  %v259 = vmul.f32 %v257, 1.442695
  %v260 = vpow.pop %v259
  %v261 = vmul.f32 %v258, 1.442695
  %v262 = vpow.pop %v261
  %v263 = vadd.f32 %v260, 1.0
  %v264 = vadd.f32 %v262, 1.0
  %v265 = vrcp.pop %v263
  %v266 = vmul.f32 1.0, %v265
  %v267 = vrcp.pop %v264
  %v268 = vmul.f32 1.0, %v267
  %v269 = vtanh.pop %v256
  %v270 = vmul.f32 %v266, %v162
  %v271 = vmul.f32 %v266, %v269
  %273 = vrot.lane.b32.xlu0 %v271, 64
  %v274 = vpop.permute.xlu0 %273
  %v276 = vadd.f32 %v270, %v274
  %v277 = vtanh.pop %v276
  %v278 = vmul.f32 %v268, %v277
  %280 = vrot.lane.b32.xlu0 %v278, 64
  %v281 = vpop.permute.xlu0 %280
  %s283 = scalar_lea.vmem %s2, 8
  %284 = vst.msk [vmem:[%s283] sm:$0xff] %vm169, %v281
  %s285 = scalar_lea.vmem %s2, 48
  %286 = vst.msk [vmem:[%s285] sm:$0xff] %vm172, %v281
  %s287 = scalar_lea.vmem %s0, 32
  %v288 = vld [vmem:[%s287] sm:$0xff]
  %v289 = vld [vmem:[%s287 + $0x8] sm:$0xff]
  %s290 = scalar_lea.vmem %s0, 80
  %v291 = vld [vmem:[%s290] sm:$0xff]
  %v292 = vld [vmem:[%s290 + $0x8] sm:$0xff]
  %v293 = vsel %vm57, %v288, %v291
  %v294 = vsel %vm58, %v289, %v292
  %v295 = vsel %vm66, %v281, 0
  %297 = vmatprep.subr.mxu0 0.0
  %298 = vmatpush1.msra.mxu0 0.0
  %299 = vmatprep.subr.mxu0 0.0
  %300 = vmatpush1.msra.mxu0 0.0
  %301 = vmatprep.subr.mxu0 0.0
  %302 = vmatpush1.msra.mxu0 0.0
  %303 = vmatprep.subr.mxu0 0.0
  %304 = vmatpush1.msra.mxu0 0.0
  %305 = vmatprep.subr.mxu0 0.0
  %306 = vmatpush1.msra.mxu0 0.0
  %307 = vmatprep.subr.mxu0 0.0
  %308 = vmatpush1.msra.mxu0 0.0
  %309 = vmatprep.subr.mxu0 0.0
  %310 = vmatpush1.msra.mxu0 0.0
  %311 = vmatprep.subr.mxu0 0.0
  %312 = vmatpush1.msra.mxu0 0.0
  %313 = vmatprep.subr.mxu0 %v29
  %314 = vmatpush1.msra.mxu0 %v28
  %315 = vmatprep.subr.mxu0 %v27
  %316 = vmatpush1.msra.mxu0 %v26
  %317 = vmatprep.subr.mxu0 %v25
  %318 = vmatpush1.msra.mxu0 %v24
  %319 = vmatprep.subr.mxu0 %v23
  %320 = vmatpush1.msra.mxu0 %v22
  %321 = vmatprep.subr.mxu0 %v21
  %322 = vmatpush1.msra.mxu0 %v20
  %323 = vmatprep.subr.mxu0 %v19
  %324 = vmatpush1.msra.mxu0 %v18
  %325 = vmatprep.subr.mxu0 %v17
  %326 = vmatpush1.msra.mxu0 %v16
  %327 = vmatprep.subr.mxu0 %v15
  %328 = vmatpush1.msra.mxu0 %v14
  %329 = vmatprep.subr.mxu0 0.0
  %330 = vmatpush2.msra.mxu0 0.0
  %331 = vmatprep.subr.mxu0 0.0
  %332 = vmatpush2.msra.mxu0 0.0
  %333 = vmatprep.subr.mxu0 0.0
  %334 = vmatpush2.msra.mxu0 0.0
  %335 = vmatprep.subr.mxu0 0.0
  %336 = vmatpush2.msra.mxu0 0.0
  %337 = vmatprep.subr.mxu0 0.0
  %338 = vmatpush2.msra.mxu0 0.0
  %339 = vmatprep.subr.mxu0 0.0
  %340 = vmatpush2.msra.mxu0 0.0
  %341 = vmatprep.subr.mxu0 0.0
  %342 = vmatpush2.msra.mxu0 0.0
  %343 = vmatprep.subr.mxu0 0.0
  %344 = vmatpush2.msra.mxu0 0.0
  %345 = vmatprep.subr.mxu0 0.0
  %346 = vmatpush2.msra.mxu0 0.0
  %347 = vmatprep.subr.mxu0 0.0
  %348 = vmatpush2.msra.mxu0 0.0
  %349 = vmatprep.subr.mxu0 0.0
  %350 = vmatpush2.msra.mxu0 0.0
  %351 = vmatprep.subr.mxu0 0.0
  %352 = vmatpush2.msra.mxu0 0.0
  %353 = vmatprep.subr.mxu0 0.0
  %354 = vmatpush2.msra.mxu0 0.0
  %355 = vmatprep.subr.mxu0 0.0
  %356 = vmatpush2.msra.mxu0 0.0
  %357 = vmatprep.subr.mxu0 0.0
  %358 = vmatpush2.msra.mxu0 0.0
  %359 = vmatprep.subr.mxu0 0.0
  %360 = vmatpush2.msra.mxu0 0.0
  %361 = vmatprep.mubr.f32.mxu0 0.0
  %362 = vmatmul.mubr.f32.gmra.mxu0 %v295
  %v363 = vpop.f32.mrf.mxu0
  %v364 = vadd.f32 0.0, %v363
  %v365 = vpop.f32.mrf.mxu0
  %v366 = vadd.f32 0.0, %v365
  %367 = vdwg.mxu0
  %v368 = vadd.f32 %v293, %v364
  %v369 = vadd.f32 %v294, %v366
  %v370 = vxor.u32 %v368, 2147483648
  %v371 = vxor.u32 %v369, 2147483648
  %v372 = vmul.f32 %v370, 1.442695
  %v373 = vpow.pop %v372
  %v374 = vmul.f32 %v371, 1.442695
  %v375 = vpow.pop %v374
  %v376 = vadd.f32 %v373, 1.0
  %v377 = vadd.f32 %v375, 1.0
  %v378 = vrcp.pop %v376
  %v379 = vmul.f32 1.0, %v378
  %v380 = vrcp.pop %v377
  %v381 = vmul.f32 1.0, %v380
  %v382 = vtanh.pop %v369
  %v383 = vmul.f32 %v379, %v276
  %v384 = vmul.f32 %v379, %v382
  %386 = vrot.lane.b32.xlu0 %v384, 64
  %v387 = vpop.permute.xlu0 %386
  %v389 = vadd.f32 %v383, %v387
  %v390 = vtanh.pop %v389
  %v391 = vmul.f32 %v381, %v390
  %393 = vrot.lane.b32.xlu0 %v391, 64
  %v394 = vpop.permute.xlu0 %393
  %s396 = scalar_lea.vmem %s2, 16
  %397 = vst.msk [vmem:[%s396] sm:$0xff] %vm169, %v394
  %s398 = scalar_lea.vmem %s2, 40
  %399 = vst.msk [vmem:[%s398] sm:$0xff] %vm172, %v394
  %s400 = scalar_lea.vmem %s0, 48
  %v401 = vld [vmem:[%s400] sm:$0xff]
  %v402 = vld [vmem:[%s400 + $0x8] sm:$0xff]
  %s403 = scalar_lea.vmem %s0, 64
  %v404 = vld [vmem:[%s403] sm:$0xff]
  %v405 = vld [vmem:[%s403 + $0x8] sm:$0xff]
  %v406 = vsel %vm57, %v401, %v404
  %v407 = vsel %vm58, %v402, %v405
  %v408 = vsel %vm66, %v394, 0
  %410 = vmatprep.subr.mxu0 0.0
  %411 = vmatpush1.msra.mxu0 0.0
  %412 = vmatprep.subr.mxu0 0.0
  %413 = vmatpush1.msra.mxu0 0.0
  %414 = vmatprep.subr.mxu0 0.0
  %415 = vmatpush1.msra.mxu0 0.0
  %416 = vmatprep.subr.mxu0 0.0
  %417 = vmatpush1.msra.mxu0 0.0
  %418 = vmatprep.subr.mxu0 0.0
  %419 = vmatpush1.msra.mxu0 0.0
  %420 = vmatprep.subr.mxu0 0.0
  %421 = vmatpush1.msra.mxu0 0.0
  %422 = vmatprep.subr.mxu0 0.0
  %423 = vmatpush1.msra.mxu0 0.0
  %424 = vmatprep.subr.mxu0 0.0
  %425 = vmatpush1.msra.mxu0 0.0
  %426 = vmatprep.subr.mxu0 %v29
  %427 = vmatpush1.msra.mxu0 %v28
  %428 = vmatprep.subr.mxu0 %v27
  %429 = vmatpush1.msra.mxu0 %v26
  %430 = vmatprep.subr.mxu0 %v25
  %431 = vmatpush1.msra.mxu0 %v24
  %432 = vmatprep.subr.mxu0 %v23
  %433 = vmatpush1.msra.mxu0 %v22
  %434 = vmatprep.subr.mxu0 %v21
  %435 = vmatpush1.msra.mxu0 %v20
  %436 = vmatprep.subr.mxu0 %v19
  %437 = vmatpush1.msra.mxu0 %v18
  %438 = vmatprep.subr.mxu0 %v17
  %439 = vmatpush1.msra.mxu0 %v16
  %440 = vmatprep.subr.mxu0 %v15
  %441 = vmatpush1.msra.mxu0 %v14
  %442 = vmatprep.subr.mxu0 0.0
  %443 = vmatpush2.msra.mxu0 0.0
  %444 = vmatprep.subr.mxu0 0.0
  %445 = vmatpush2.msra.mxu0 0.0
  %446 = vmatprep.subr.mxu0 0.0
  %447 = vmatpush2.msra.mxu0 0.0
  %448 = vmatprep.subr.mxu0 0.0
  %449 = vmatpush2.msra.mxu0 0.0
  %450 = vmatprep.subr.mxu0 0.0
  %451 = vmatpush2.msra.mxu0 0.0
  %452 = vmatprep.subr.mxu0 0.0
  %453 = vmatpush2.msra.mxu0 0.0
  %454 = vmatprep.subr.mxu0 0.0
  %455 = vmatpush2.msra.mxu0 0.0
  %456 = vmatprep.subr.mxu0 0.0
  %457 = vmatpush2.msra.mxu0 0.0
  %458 = vmatprep.subr.mxu0 0.0
  %459 = vmatpush2.msra.mxu0 0.0
  %460 = vmatprep.subr.mxu0 0.0
  %461 = vmatpush2.msra.mxu0 0.0
  %462 = vmatprep.subr.mxu0 0.0
  %463 = vmatpush2.msra.mxu0 0.0
  %464 = vmatprep.subr.mxu0 0.0
  %465 = vmatpush2.msra.mxu0 0.0
  %466 = vmatprep.subr.mxu0 0.0
  %467 = vmatpush2.msra.mxu0 0.0
  %468 = vmatprep.subr.mxu0 0.0
  %469 = vmatpush2.msra.mxu0 0.0
  %470 = vmatprep.subr.mxu0 0.0
  %471 = vmatpush2.msra.mxu0 0.0
  %472 = vmatprep.subr.mxu0 0.0
  %473 = vmatpush2.msra.mxu0 0.0
  %474 = vmatprep.mubr.f32.mxu0 0.0
  %475 = vmatmul.mubr.f32.gmra.mxu0 %v408
  %v476 = vpop.f32.mrf.mxu0
  %v477 = vadd.f32 0.0, %v476
  %v478 = vpop.f32.mrf.mxu0
  %v479 = vadd.f32 0.0, %v478
  %480 = vdwg.mxu0
  %v481 = vadd.f32 %v406, %v477
  %v482 = vadd.f32 %v407, %v479
  %v483 = vxor.u32 %v481, 2147483648
  %v484 = vxor.u32 %v482, 2147483648
  %v485 = vmul.f32 %v483, 1.442695
  %v486 = vpow.pop %v485
  %v487 = vmul.f32 %v484, 1.442695
  %v488 = vpow.pop %v487
  %v489 = vadd.f32 %v486, 1.0
  %v490 = vadd.f32 %v488, 1.0
  %v491 = vrcp.pop %v489
  %v492 = vmul.f32 1.0, %v491
  %v493 = vrcp.pop %v490
  %v494 = vmul.f32 1.0, %v493
  %v495 = vtanh.pop %v482
  %v496 = vmul.f32 %v492, %v389
  %v497 = vmul.f32 %v492, %v495
  %499 = vrot.lane.b32.xlu0 %v497, 64
  %v500 = vpop.permute.xlu0 %499
  %v502 = vadd.f32 %v496, %v500
  %v503 = vtanh.pop %v502
  %v504 = vmul.f32 %v494, %v503
  %506 = vrot.lane.b32.xlu0 %v504, 64
  %v507 = vpop.permute.xlu0 %506
  %s509 = scalar_lea.vmem %s2, 24
  %510 = vst.msk [vmem:[%s509] sm:$0xff] %vm169, %v507
  %s511 = scalar_lea.vmem %s2, 32
  %512 = vst.msk [vmem:[%s511] sm:$0xff] %vm172, %v507
  %v513 = vld [vmem:[%s403] sm:$0xff]
  %v514 = vld [vmem:[%s403 + $0x8] sm:$0xff]
  %v515 = vld [vmem:[%s400] sm:$0xff]
  %v516 = vld [vmem:[%s400 + $0x8] sm:$0xff]
  %v517 = vsel %vm57, %v513, %v515
  %v518 = vsel %vm58, %v514, %v516
  %v519 = vsel %vm66, %v507, 0
  %521 = vmatprep.subr.mxu0 0.0
  %522 = vmatpush1.msra.mxu0 0.0
  %523 = vmatprep.subr.mxu0 0.0
  %524 = vmatpush1.msra.mxu0 0.0
  %525 = vmatprep.subr.mxu0 0.0
  %526 = vmatpush1.msra.mxu0 0.0
  %527 = vmatprep.subr.mxu0 0.0
  %528 = vmatpush1.msra.mxu0 0.0
  %529 = vmatprep.subr.mxu0 0.0
  %530 = vmatpush1.msra.mxu0 0.0
  %531 = vmatprep.subr.mxu0 0.0
  %532 = vmatpush1.msra.mxu0 0.0
  %533 = vmatprep.subr.mxu0 0.0
  %534 = vmatpush1.msra.mxu0 0.0
  %535 = vmatprep.subr.mxu0 0.0
  %536 = vmatpush1.msra.mxu0 0.0
  %537 = vmatprep.subr.mxu0 %v29
  %538 = vmatpush1.msra.mxu0 %v28
  %539 = vmatprep.subr.mxu0 %v27
  %540 = vmatpush1.msra.mxu0 %v26
  %541 = vmatprep.subr.mxu0 %v25
  %542 = vmatpush1.msra.mxu0 %v24
  %543 = vmatprep.subr.mxu0 %v23
  %544 = vmatpush1.msra.mxu0 %v22
  %545 = vmatprep.subr.mxu0 %v21
  %546 = vmatpush1.msra.mxu0 %v20
  %547 = vmatprep.subr.mxu0 %v19
  %548 = vmatpush1.msra.mxu0 %v18
  %549 = vmatprep.subr.mxu0 %v17
  %550 = vmatpush1.msra.mxu0 %v16
  %551 = vmatprep.subr.mxu0 %v15
  %552 = vmatpush1.msra.mxu0 %v14
  %553 = vmatprep.subr.mxu0 0.0
  %554 = vmatpush2.msra.mxu0 0.0
  %555 = vmatprep.subr.mxu0 0.0
  %556 = vmatpush2.msra.mxu0 0.0
  %557 = vmatprep.subr.mxu0 0.0
  %558 = vmatpush2.msra.mxu0 0.0
  %559 = vmatprep.subr.mxu0 0.0
  %560 = vmatpush2.msra.mxu0 0.0
  %561 = vmatprep.subr.mxu0 0.0
  %562 = vmatpush2.msra.mxu0 0.0
  %563 = vmatprep.subr.mxu0 0.0
  %564 = vmatpush2.msra.mxu0 0.0
  %565 = vmatprep.subr.mxu0 0.0
  %566 = vmatpush2.msra.mxu0 0.0
  %567 = vmatprep.subr.mxu0 0.0
  %568 = vmatpush2.msra.mxu0 0.0
  %569 = vmatprep.subr.mxu0 0.0
  %570 = vmatpush2.msra.mxu0 0.0
  %571 = vmatprep.subr.mxu0 0.0
  %572 = vmatpush2.msra.mxu0 0.0
  %573 = vmatprep.subr.mxu0 0.0
  %574 = vmatpush2.msra.mxu0 0.0
  %575 = vmatprep.subr.mxu0 0.0
  %576 = vmatpush2.msra.mxu0 0.0
  %577 = vmatprep.subr.mxu0 0.0
  %578 = vmatpush2.msra.mxu0 0.0
  %579 = vmatprep.subr.mxu0 0.0
  %580 = vmatpush2.msra.mxu0 0.0
  %581 = vmatprep.subr.mxu0 0.0
  %582 = vmatpush2.msra.mxu0 0.0
  %583 = vmatprep.subr.mxu0 0.0
  %584 = vmatpush2.msra.mxu0 0.0
  %585 = vmatprep.mubr.f32.mxu0 0.0
  %586 = vmatmul.mubr.f32.gmra.mxu0 %v519
  %v587 = vpop.f32.mrf.mxu0
  %v588 = vadd.f32 0.0, %v587
  %v589 = vpop.f32.mrf.mxu0
  %v590 = vadd.f32 0.0, %v589
  %591 = vdwg.mxu0
  %v592 = vadd.f32 %v517, %v588
  %v593 = vadd.f32 %v518, %v590
  %v594 = vxor.u32 %v592, 2147483648
  %v595 = vxor.u32 %v593, 2147483648
  %v596 = vmul.f32 %v594, 1.442695
  %v597 = vpow.pop %v596
  %v598 = vmul.f32 %v595, 1.442695
  %v599 = vpow.pop %v598
  %v600 = vadd.f32 %v597, 1.0
  %v601 = vadd.f32 %v599, 1.0
  %v602 = vrcp.pop %v600
  %v603 = vmul.f32 1.0, %v602
  %v604 = vrcp.pop %v601
  %v605 = vmul.f32 1.0, %v604
  %v606 = vtanh.pop %v593
  %v607 = vmul.f32 %v603, %v502
  %v608 = vmul.f32 %v603, %v606
  %610 = vrot.lane.b32.xlu0 %v608, 64
  %v611 = vpop.permute.xlu0 %610
  %v613 = vadd.f32 %v607, %v611
  %v614 = vtanh.pop %v613
  %v615 = vmul.f32 %v605, %v614
  %617 = vrot.lane.b32.xlu0 %v615, 64
  %v618 = vpop.permute.xlu0 %617
  %620 = vst.msk [vmem:[%s511] sm:$0xff] %vm169, %v618
  %621 = vst.msk [vmem:[%s509] sm:$0xff] %vm172, %v618
  %v622 = vld [vmem:[%s290] sm:$0xff]
  %v623 = vld [vmem:[%s290 + $0x8] sm:$0xff]
  %v624 = vld [vmem:[%s287] sm:$0xff]
  %v625 = vld [vmem:[%s287 + $0x8] sm:$0xff]
  %v626 = vsel %vm57, %v622, %v624
  %v627 = vsel %vm58, %v623, %v625
  %v628 = vsel %vm66, %v618, 0
  %630 = vmatprep.subr.mxu0 0.0
  %631 = vmatpush1.msra.mxu0 0.0
  %632 = vmatprep.subr.mxu0 0.0
  %633 = vmatpush1.msra.mxu0 0.0
  %634 = vmatprep.subr.mxu0 0.0
  %635 = vmatpush1.msra.mxu0 0.0
  %636 = vmatprep.subr.mxu0 0.0
  %637 = vmatpush1.msra.mxu0 0.0
  %638 = vmatprep.subr.mxu0 0.0
  %639 = vmatpush1.msra.mxu0 0.0
  %640 = vmatprep.subr.mxu0 0.0
  %641 = vmatpush1.msra.mxu0 0.0
  %642 = vmatprep.subr.mxu0 0.0
  %643 = vmatpush1.msra.mxu0 0.0
  %644 = vmatprep.subr.mxu0 0.0
  %645 = vmatpush1.msra.mxu0 0.0
  %646 = vmatprep.subr.mxu0 %v29
  %647 = vmatpush1.msra.mxu0 %v28
  %648 = vmatprep.subr.mxu0 %v27
  %649 = vmatpush1.msra.mxu0 %v26
  %650 = vmatprep.subr.mxu0 %v25
  %651 = vmatpush1.msra.mxu0 %v24
  %652 = vmatprep.subr.mxu0 %v23
  %653 = vmatpush1.msra.mxu0 %v22
  %654 = vmatprep.subr.mxu0 %v21
  %655 = vmatpush1.msra.mxu0 %v20
  %656 = vmatprep.subr.mxu0 %v19
  %657 = vmatpush1.msra.mxu0 %v18
  %658 = vmatprep.subr.mxu0 %v17
  %659 = vmatpush1.msra.mxu0 %v16
  %660 = vmatprep.subr.mxu0 %v15
  %661 = vmatpush1.msra.mxu0 %v14
  %662 = vmatprep.subr.mxu0 0.0
  %663 = vmatpush2.msra.mxu0 0.0
  %664 = vmatprep.subr.mxu0 0.0
  %665 = vmatpush2.msra.mxu0 0.0
  %666 = vmatprep.subr.mxu0 0.0
  %667 = vmatpush2.msra.mxu0 0.0
  %668 = vmatprep.subr.mxu0 0.0
  %669 = vmatpush2.msra.mxu0 0.0
  %670 = vmatprep.subr.mxu0 0.0
  %671 = vmatpush2.msra.mxu0 0.0
  %672 = vmatprep.subr.mxu0 0.0
  %673 = vmatpush2.msra.mxu0 0.0
  %674 = vmatprep.subr.mxu0 0.0
  %675 = vmatpush2.msra.mxu0 0.0
  %676 = vmatprep.subr.mxu0 0.0
  %677 = vmatpush2.msra.mxu0 0.0
  %678 = vmatprep.subr.mxu0 0.0
  %679 = vmatpush2.msra.mxu0 0.0
  %680 = vmatprep.subr.mxu0 0.0
  %681 = vmatpush2.msra.mxu0 0.0
  %682 = vmatprep.subr.mxu0 0.0
  %683 = vmatpush2.msra.mxu0 0.0
  %684 = vmatprep.subr.mxu0 0.0
  %685 = vmatpush2.msra.mxu0 0.0
  %686 = vmatprep.subr.mxu0 0.0
  %687 = vmatpush2.msra.mxu0 0.0
  %688 = vmatprep.subr.mxu0 0.0
  %689 = vmatpush2.msra.mxu0 0.0
  %690 = vmatprep.subr.mxu0 0.0
  %691 = vmatpush2.msra.mxu0 0.0
  %692 = vmatprep.subr.mxu0 0.0
  %693 = vmatpush2.msra.mxu0 0.0
  %694 = vmatprep.mubr.f32.mxu0 0.0
  %695 = vmatmul.mubr.f32.gmra.mxu0 %v628
  %v696 = vpop.f32.mrf.mxu0
  %v697 = vadd.f32 0.0, %v696
  %v698 = vpop.f32.mrf.mxu0
  %v699 = vadd.f32 0.0, %v698
  %700 = vdwg.mxu0
  %v701 = vadd.f32 %v626, %v697
  %v702 = vadd.f32 %v627, %v699
  %v703 = vxor.u32 %v701, 2147483648
  %v704 = vxor.u32 %v702, 2147483648
  %v705 = vmul.f32 %v703, 1.442695
  %v706 = vpow.pop %v705
  %v707 = vmul.f32 %v704, 1.442695
  %v708 = vpow.pop %v707
  %v709 = vadd.f32 %v706, 1.0
  %v710 = vadd.f32 %v708, 1.0
  %v711 = vrcp.pop %v709
  %v712 = vmul.f32 1.0, %v711
  %v713 = vrcp.pop %v710
  %v714 = vmul.f32 1.0, %v713
  %v715 = vtanh.pop %v702
  %v716 = vmul.f32 %v712, %v613
  %v717 = vmul.f32 %v712, %v715
  %719 = vrot.lane.b32.xlu0 %v717, 64
  %v720 = vpop.permute.xlu0 %719
  %v722 = vadd.f32 %v716, %v720
  %v723 = vtanh.pop %v722
  %v724 = vmul.f32 %v714, %v723
  %726 = vrot.lane.b32.xlu0 %v724, 64
  %v727 = vpop.permute.xlu0 %726
  %729 = vst.msk [vmem:[%s398] sm:$0xff] %vm169, %v727
  %730 = vst.msk [vmem:[%s396] sm:$0xff] %vm172, %v727
  %v731 = vld [vmem:[%s177] sm:$0xff]
  %v732 = vld [vmem:[%s177 + $0x8] sm:$0xff]
  %v733 = vld [vmem:[%s174] sm:$0xff]
  %v734 = vld [vmem:[%s174 + $0x8] sm:$0xff]
  %v735 = vsel %vm57, %v731, %v733
  %v736 = vsel %vm58, %v732, %v734
  %v737 = vsel %vm66, %v727, 0
  %739 = vmatprep.subr.mxu0 0.0
  %740 = vmatpush1.msra.mxu0 0.0
  %741 = vmatprep.subr.mxu0 0.0
  %742 = vmatpush1.msra.mxu0 0.0
  %743 = vmatprep.subr.mxu0 0.0
  %744 = vmatpush1.msra.mxu0 0.0
  %745 = vmatprep.subr.mxu0 0.0
  %746 = vmatpush1.msra.mxu0 0.0
  %747 = vmatprep.subr.mxu0 0.0
  %748 = vmatpush1.msra.mxu0 0.0
  %749 = vmatprep.subr.mxu0 0.0
  %750 = vmatpush1.msra.mxu0 0.0
  %751 = vmatprep.subr.mxu0 0.0
  %752 = vmatpush1.msra.mxu0 0.0
  %753 = vmatprep.subr.mxu0 0.0
  %754 = vmatpush1.msra.mxu0 0.0
  %755 = vmatprep.subr.mxu0 %v29
  %756 = vmatpush1.msra.mxu0 %v28
  %757 = vmatprep.subr.mxu0 %v27
  %758 = vmatpush1.msra.mxu0 %v26
  %759 = vmatprep.subr.mxu0 %v25
  %760 = vmatpush1.msra.mxu0 %v24
  %761 = vmatprep.subr.mxu0 %v23
  %762 = vmatpush1.msra.mxu0 %v22
  %763 = vmatprep.subr.mxu0 %v21
  %764 = vmatpush1.msra.mxu0 %v20
  %765 = vmatprep.subr.mxu0 %v19
  %766 = vmatpush1.msra.mxu0 %v18
  %767 = vmatprep.subr.mxu0 %v17
  %768 = vmatpush1.msra.mxu0 %v16
  %769 = vmatprep.subr.mxu0 %v15
  %770 = vmatpush1.msra.mxu0 %v14
  %771 = vmatprep.subr.mxu0 0.0
  %772 = vmatpush2.msra.mxu0 0.0
  %773 = vmatprep.subr.mxu0 0.0
  %774 = vmatpush2.msra.mxu0 0.0
  %775 = vmatprep.subr.mxu0 0.0
  %776 = vmatpush2.msra.mxu0 0.0
  %777 = vmatprep.subr.mxu0 0.0
  %778 = vmatpush2.msra.mxu0 0.0
  %779 = vmatprep.subr.mxu0 0.0
  %780 = vmatpush2.msra.mxu0 0.0
  %781 = vmatprep.subr.mxu0 0.0
  %782 = vmatpush2.msra.mxu0 0.0
  %783 = vmatprep.subr.mxu0 0.0
  %784 = vmatpush2.msra.mxu0 0.0
  %785 = vmatprep.subr.mxu0 0.0
  %786 = vmatpush2.msra.mxu0 0.0
  %787 = vmatprep.subr.mxu0 0.0
  %788 = vmatpush2.msra.mxu0 0.0
  %789 = vmatprep.subr.mxu0 0.0
  %790 = vmatpush2.msra.mxu0 0.0
  %791 = vmatprep.subr.mxu0 0.0
  %792 = vmatpush2.msra.mxu0 0.0
  %793 = vmatprep.subr.mxu0 0.0
  %794 = vmatpush2.msra.mxu0 0.0
  %795 = vmatprep.subr.mxu0 0.0
  %796 = vmatpush2.msra.mxu0 0.0
  %797 = vmatprep.subr.mxu0 0.0
  %798 = vmatpush2.msra.mxu0 0.0
  %799 = vmatprep.subr.mxu0 0.0
  %800 = vmatpush2.msra.mxu0 0.0
  %801 = vmatprep.subr.mxu0 0.0
  %802 = vmatpush2.msra.mxu0 0.0
  %803 = vmatprep.mubr.f32.mxu0 0.0
  %804 = vmatmul.mubr.f32.gmra.mxu0 %v737
  %v805 = vpop.f32.mrf.mxu0
  %v806 = vadd.f32 0.0, %v805
  %v807 = vpop.f32.mrf.mxu0
  %v808 = vadd.f32 0.0, %v807
  %809 = vdwg.mxu0
  %v810 = vadd.f32 %v735, %v806
  %v811 = vadd.f32 %v736, %v808
  %v812 = vxor.u32 %v810, 2147483648
  %v813 = vxor.u32 %v811, 2147483648
  %v814 = vmul.f32 %v812, 1.442695
  %v815 = vpow.pop %v814
  %v816 = vmul.f32 %v813, 1.442695
  %v817 = vpow.pop %v816
  %v818 = vadd.f32 %v815, 1.0
  %v819 = vadd.f32 %v817, 1.0
  %v820 = vrcp.pop %v818
  %v821 = vmul.f32 1.0, %v820
  %v822 = vrcp.pop %v819
  %v823 = vmul.f32 1.0, %v822
  %v824 = vtanh.pop %v811
  %v825 = vmul.f32 %v821, %v722
  %v826 = vmul.f32 %v821, %v824
  %828 = vrot.lane.b32.xlu0 %v826, 64
  %v829 = vpop.permute.xlu0 %828
  %v831 = vadd.f32 %v825, %v829
  %v832 = vtanh.pop %v831
  %v833 = vmul.f32 %v823, %v832
  %835 = vrot.lane.b32.xlu0 %v833, 64
  %v836 = vpop.permute.xlu0 %835
  %838 = vst.msk [vmem:[%s285] sm:$0xff] %vm169, %v836
  %839 = vst.msk [vmem:[%s283] sm:$0xff] %vm172, %v836
  %v840 = vld [vmem:[%s61] sm:$0xff]
  %v841 = vld [vmem:[%s61 + $0x8] sm:$0xff]
  %v842 = vld [vmem:[%s0] sm:$0xff]
  %v843 = vld [vmem:[%s0 + $0x8] sm:$0xff]
  %v844 = vsel %vm57, %v840, %v842
  %v845 = vsel %vm58, %v841, %v843
  %v846 = vsel %vm66, %v836, 0
  %848 = vmatprep.subr.mxu0 0.0
  %849 = vmatpush1.msra.mxu0 0.0
  %850 = vmatprep.subr.mxu0 0.0
  %851 = vmatpush1.msra.mxu0 0.0
  %852 = vmatprep.subr.mxu0 0.0
  %853 = vmatpush1.msra.mxu0 0.0
  %854 = vmatprep.subr.mxu0 0.0
  %855 = vmatpush1.msra.mxu0 0.0
  %856 = vmatprep.subr.mxu0 0.0
  %857 = vmatpush1.msra.mxu0 0.0
  %858 = vmatprep.subr.mxu0 0.0
  %859 = vmatpush1.msra.mxu0 0.0
  %860 = vmatprep.subr.mxu0 0.0
  %861 = vmatpush1.msra.mxu0 0.0
  %862 = vmatprep.subr.mxu0 0.0
  %863 = vmatpush1.msra.mxu0 0.0
  %864 = vmatprep.subr.mxu0 %v29
  %865 = vmatpush1.msra.mxu0 %v28
  %866 = vmatprep.subr.mxu0 %v27
  %867 = vmatpush1.msra.mxu0 %v26
  %868 = vmatprep.subr.mxu0 %v25
  %869 = vmatpush1.msra.mxu0 %v24
  %870 = vmatprep.subr.mxu0 %v23
  %871 = vmatpush1.msra.mxu0 %v22
  %872 = vmatprep.subr.mxu0 %v21
  %873 = vmatpush1.msra.mxu0 %v20
  %874 = vmatprep.subr.mxu0 %v19
  %875 = vmatpush1.msra.mxu0 %v18
  %876 = vmatprep.subr.mxu0 %v17
  %877 = vmatpush1.msra.mxu0 %v16
  %878 = vmatprep.subr.mxu0 %v15
  %879 = vmatpush1.msra.mxu0 %v14
  %880 = vmatprep.subr.mxu0 0.0
  %881 = vmatpush2.msra.mxu0 0.0
  %882 = vmatprep.subr.mxu0 0.0
  %883 = vmatpush2.msra.mxu0 0.0
  %884 = vmatprep.subr.mxu0 0.0
  %885 = vmatpush2.msra.mxu0 0.0
  %886 = vmatprep.subr.mxu0 0.0
  %887 = vmatpush2.msra.mxu0 0.0
  %888 = vmatprep.subr.mxu0 0.0
  %889 = vmatpush2.msra.mxu0 0.0
  %890 = vmatprep.subr.mxu0 0.0
  %891 = vmatpush2.msra.mxu0 0.0
  %892 = vmatprep.subr.mxu0 0.0
  %893 = vmatpush2.msra.mxu0 0.0
  %894 = vmatprep.subr.mxu0 0.0
  %895 = vmatpush2.msra.mxu0 0.0
  %896 = vmatprep.subr.mxu0 0.0
  %897 = vmatpush2.msra.mxu0 0.0
  %898 = vmatprep.subr.mxu0 0.0
  %899 = vmatpush2.msra.mxu0 0.0
  %900 = vmatprep.subr.mxu0 0.0
  %901 = vmatpush2.msra.mxu0 0.0
  %902 = vmatprep.subr.mxu0 0.0
  %903 = vmatpush2.msra.mxu0 0.0
  %904 = vmatprep.subr.mxu0 0.0
  %905 = vmatpush2.msra.mxu0 0.0
  %906 = vmatprep.subr.mxu0 0.0
  %907 = vmatpush2.msra.mxu0 0.0
  %908 = vmatprep.subr.mxu0 0.0
  %909 = vmatpush2.msra.mxu0 0.0
  %910 = vmatprep.subr.mxu0 0.0
  %911 = vmatpush2.msra.mxu0 0.0
  %912 = vmatprep.mubr.f32.mxu0 0.0
  %913 = vmatmul.mubr.f32.gmra.mxu0 %v846
  %v914 = vpop.f32.mrf.mxu0
  %v915 = vadd.f32 0.0, %v914
  %v916 = vpop.f32.mrf.mxu0
  %v917 = vadd.f32 0.0, %v916
  %918 = vdwg.mxu0
  %v919 = vadd.f32 %v844, %v915
  %v920 = vadd.f32 %v845, %v917
  %v921 = vxor.u32 %v919, 2147483648
  %v922 = vxor.u32 %v920, 2147483648
  %v923 = vmul.f32 %v921, 1.442695
  %v924 = vpow.pop %v923
  %v925 = vmul.f32 %v922, 1.442695
  %v926 = vpow.pop %v925
  %v927 = vadd.f32 %v924, 1.0
  %v928 = vadd.f32 %v926, 1.0
  %v929 = vrcp.pop %v927
  %v930 = vmul.f32 1.0, %v929
  %v931 = vrcp.pop %v928
  %v932 = vmul.f32 1.0, %v931
  %v933 = vtanh.pop %v920
  %v934 = vmul.f32 %v930, %v831
  %v935 = vmul.f32 %v930, %v933
  %937 = vrot.lane.b32.xlu0 %v935, 64
  %v938 = vpop.permute.xlu0 %937
  %v940 = vadd.f32 %v934, %v938
  %v941 = vtanh.pop %v940
  %v942 = vmul.f32 %v932, %v941
  %944 = vrot.lane.b32.xlu0 %v942, 64
  %v945 = vpop.permute.xlu0 %944
  %947 = vst.msk [vmem:[%s171] sm:$0xff] %vm169, %v945
  %948 = vst.msk [vmem:[%s2] sm:$0xff] %vm172, %v945
  %949 = vst.msk [vmem:[%s3] sm:$0xff] %vm169, %v945
  %951 = vrot.lane.b32.xlu0 %v940, 64
  %v952 = vpop.permute.xlu0 %951
  %954 = vst.msk [vmem:[%s4] sm:$0xff] %vm169, %v952
  %955 = vrot.lane.b32.xlu0 %v942, 32
  %v956 = vpop.permute.xlu0 %955
  %s958 = scalar_lea.vmem %s3, 8
  %959 = vst.msk [vmem:[%s958] sm:$0xff] %vm169, %v956
  %960 = vrot.lane.b32.xlu0 %v940, 32
  %v961 = vpop.permute.xlu0 %960
  %s963 = scalar_lea.vmem %s4, 8
  %964 = vst.msk [vmem:[%s963] sm:$0xff] %vm169, %v961
  // Predicated region
  $region10: #{lean_forward.1} parent=0 // pred_check
    _
  $region11: #{lean_forward.1} parent=0 // pred_check_branch
    %966 = sbr.rel (0) target = $region13
  $region12: #{lean_forward.1} parent=0 // pred_region
    _
  $region13: #{lean_forward.1} parent=0 // pred_fallthru
    _
  // Predicated region
  $region14: #{lean_forward.1} parent=0 // pred_check
    _
  $region15: #{lean_forward.1} parent=0 // pred_check_branch
    %968 = sbr.rel (0) target = $region17
  $region16: #{lean_forward.1} parent=0 // pred_region
    _
  $region17: #{lean_forward.1} parent=0 // pred_fallthru
    _
  // Predicated region
  $region18: #{lean_forward.1} parent=0 // pred_check
    _
  $region19: #{lean_forward.1} parent=0 // pred_check_branch
    %970 = sbr.rel (0) target = $region21
  $region20: #{lean_forward.1} parent=0 // pred_region
    _
  $region21: #{lean_forward.1} parent=0 // pred_fallthru
    _
  // Predicated region
  $region22: #{lean_forward.1} parent=0 // pred_check
    _
  $region23: #{lean_forward.1} parent=0 // pred_check_branch
    %972 = sbr.rel (0) target = $region25
  $region24: #{lean_forward.1} parent=0 // pred_region
    _
  $region25: #{lean_forward.1} parent=0 // pred_fallthru
    _
  // Predicated region
  $region26: #{lean_forward.1} parent=0 // pred_check
    _
  $region27: #{lean_forward.1} parent=0 // pred_check_branch
    %974 = sbr.rel (0) target = $region29
  $region28: #{lean_forward.1} parent=0 // pred_region
    _
  $region29: #{lean_forward.1} parent=0 // pred_fallthru
    _
  // Predicated region
  $region30: #{lean_forward.1} parent=0 // pred_check
    _
  $region31: #{lean_forward.1} parent=0 // pred_check_branch
    %976 = sbr.rel (0) target = $region33
  $region32: #{lean_forward.1} parent=0 // pred_region
    _
  $region33: #{lean_forward.1} parent=0 // pred_fallthru
    _

</llo_original>
